<compile_context>
chip_gen: v5e
topology: v5e:2x2
jax: 0.10.0
libtpu: 0.0.40
codegen_flags: <defaults>
</compile_context>

<pallas_src>
import functools
import math

import jax
import jax.numpy as jnp
from jax.experimental import pallas as pl
from jax.experimental.pallas import tpu as pltpu


# ------------- signatory.logsignature_channels (free Lie algebra dim) -------------
def _mobius(n: int) -> int:
    if n == 1:
        return 1
    result, p, m = 1, 2, n
    while p * p <= m:
        if m % p == 0:
            m //= p
            if m % p == 0:
                return 0
            result = -result
        p += 1
    if m > 1:
        result = -result
    return result


def logsignature_channels(in_channels: int, depth: int) -> int:
    total = 0
    for k in range(1, depth + 1):
        s = 0
        for j in range(1, k + 1):
            if k % j == 0:
                s += _mobius(j) * in_channels ** (k // j)
        total += s // k
    return total


# --------------------------- single-step Pallas kernel ---------------------------
def _cf_loss_single_kernel(coeff_ref, x_ref, loss_ref, *,
                           n_fake, inv_nf, inv_nr, inv_b):
    """Whole problem VMEM-resident: one phase matmul, one cos/sin pass, done.

    coeff_ref : (B, L)  f32, already scaled by t on the host
    x_ref     : (L, N)  f32, lane-dense [fake | real] sample matrix
    loss_ref  : (1, 1)  f32
    """
    # (B, L) @ (L, N) -> (B, N) phases, native MXU form (no transposed RHS).
    ph = jnp.dot(coeff_ref[...], x_ref[...], preferred_element_type=jnp.float32)

    cos_ph = jnp.cos(ph)                                    # EUP
    sin_ph = jnp.sin(ph)                                    # EUP

    # Static fake/real split, then per-stream means (XLU lane reduce; XLU is idle).
    f_re = jnp.sum(cos_ph[:, :n_fake], axis=1, keepdims=True) * inv_nf
    f_im = jnp.sum(sin_ph[:, :n_fake], axis=1, keepdims=True) * inv_nf
    r_re = jnp.sum(cos_ph[:, n_fake:], axis=1, keepdims=True) * inv_nr
    r_im = jnp.sum(sin_ph[:, n_fake:], axis=1, keepdims=True) * inv_nr

    d_re = f_re - r_re
    d_im = f_im - r_im
    # D_loss = -1/B * sum_b |char_fake_b - char_real_b|^2
    loss_ref[...] = -inv_b * jnp.sum(d_re * d_re + d_im * d_im,
                                     axis=0, keepdims=True)


# -------------------------- tiled Pallas kernel (large N) -------------------------
def _cf_loss_tiled_kernel(coeff_ref, x_ref, loss_ref,
                          acc_f_re, acc_f_im, acc_r_re, acc_r_im,
                          *, n_fake_tiles, n_tiles, pad_fake, pad_real,
                          inv_nf, inv_nr, inv_b):
    """Grid axis 0 streams lane-dense (L, tile_n) tiles of [fake_pad | real_pad].

    fake/real are each zero-padded to a tile multiple on the host, so tiles
    never straddle the boundary; padded columns contribute exactly cos=1, sin=0
    and are subtracted at finalize.
    """
    k = pl.program_id(0)

    @pl.when(k == 0)
    def _init():
        acc_f_re[...] = jnp.zeros_like(acc_f_re)
        acc_f_im[...] = jnp.zeros_like(acc_f_im)
        acc_r_re[...] = jnp.zeros_like(acc_r_re)
        acc_r_im[...] = jnp.zeros_like(acc_r_im)

    ph = jnp.dot(coeff_ref[...], x_ref[...],
                 preferred_element_type=jnp.float32)        # (B, tile_n)
    cos_sum = jnp.sum(jnp.cos(ph), axis=1, keepdims=True)   # (B, 1)
    sin_sum = jnp.sum(jnp.sin(ph), axis=1, keepdims=True)   # (B, 1)

    @pl.when(k < n_fake_tiles)
    def _acc_fake():
        acc_f_re[...] += cos_sum
        acc_f_im[...] += sin_sum

    @pl.when(k >= n_fake_tiles)
    def _acc_real():
        acc_r_re[...] += cos_sum
        acc_r_im[...] += sin_sum

    @pl.when(k == n_tiles - 1)
    def _finalize():
        f_re = (acc_f_re[...] - pad_fake) * inv_nf
        f_im = acc_f_im[...] * inv_nf
        r_re = (acc_r_re[...] - pad_real) * inv_nr
        r_im = acc_r_im[...] * inv_nr
        d_re = f_re - r_re
        d_im = f_im - r_im
        loss_ref[...] = -inv_b * jnp.sum(d_re * d_re + d_im * d_im,
                                         axis=0, keepdims=True)


# ----------------------------------- wrapper --------------------------------------
def grid_characteristic_discriminator_forward(coefficients, x_fake_logsig,
                                              x_real_logsig, t=0.1,
                                              *, single_step_budget_bytes=8 << 20,
                                              tile_n=8192):
    """Returns (D_loss, coefficients) — mirroring the PyTorch forward."""
    B, L = coefficients.shape
    n_fake, Lf = x_fake_logsig.shape
    n_real, Lr = x_real_logsig.shape
    assert Lf == L and Lr == L, "sample feature dim must match logsig_length"

    # Fold t into the (B, L) coefficient grid once, outside the kernel.
    c_scaled = (t * coefficients).astype(jnp.float32)

    # Lane-dense (L, N) sample layout; for a static sample set this transpose/
    # concat should be hoisted out of the training loop (it is a one-time copy).
    xf = x_fake_logsig.astype(jnp.float32).T                 # (L, n_fake)
    xr = x_real_logsig.astype(jnp.float32).T                 # (L, n_real)

    n_total = n_fake + n_real
    inv_nf, inv_nr, inv_b = 1.0 / n_fake, 1.0 / n_real, 1.0 / B

    # Live footprint of the single-step kernel: x_all + ph/cos/sin temps.
    footprint = n_total * (4 * L + 3 * 4 * B)

    if footprint <= single_step_budget_bytes:
        # ---- single VMEM-resident step: no accumulators, no per-step overhead ----
        x_all = jnp.concatenate([xf, xr], axis=1)            # (L, n_total)
        kernel = functools.partial(
            _cf_loss_single_kernel, n_fake=n_fake,
            inv_nf=inv_nf, inv_nr=inv_nr, inv_b=inv_b)
        loss = pl.pallas_call(
            kernel,
            out_shape=jax.ShapeDtypeStruct((1, 1), jnp.float32),
            grid=(1,),
            in_specs=[
                pl.BlockSpec((B, L), lambda i: (0, 0)),       # t * coefficients
                pl.BlockSpec((L, n_total), lambda i: (0, 0)),  # all samples
            ],
            out_specs=pl.BlockSpec((1, 1), lambda i: (0, 0)),
            compiler_params=pltpu.CompilerParams(
                dimension_semantics=("arbitrary",)),
        )(c_scaled, x_all)
    else:
        # ---- large-N fallback: big lane-dense tiles streamed over one grid axis ----
        def pad_cols(x, n):
            n_pad = (-n) % tile_n
            if n_pad:
                x = jnp.pad(x, ((0, 0), (0, n_pad)))
            return x, n_pad

        xf_p, pad_f = pad_cols(xf, n_fake)
        xr_p, pad_r = pad_cols(xr, n_real)
        x_all = jnp.concatenate([xf_p, xr_p], axis=1)         # (L, padded total)
        nf_tiles = xf_p.shape[1] // tile_n
        nr_tiles = xr_p.shape[1] // tile_n
        n_tiles = nf_tiles + nr_tiles

        kernel = functools.partial(
            _cf_loss_tiled_kernel,
            n_fake_tiles=nf_tiles, n_tiles=n_tiles,
            pad_fake=float(pad_f), pad_real=float(pad_r),
            inv_nf=inv_nf, inv_nr=inv_nr, inv_b=inv_b)
        # TODO(synk): for very large N on v7x, split this reduction axis across the
        # two TensorCores (leading "parallel" axis + tiny combine in the wrapper).
        loss = pl.pallas_call(
            kernel,
            out_shape=jax.ShapeDtypeStruct((1, 1), jnp.float32),
            grid=(n_tiles,),
            in_specs=[
                pl.BlockSpec((B, L), lambda k: (0, 0)),        # resident coeffs
                pl.BlockSpec((L, tile_n), lambda k: (0, k)),   # lane-dense tile
            ],
            out_specs=pl.BlockSpec((1, 1), lambda k: (0, 0)),
            scratch_shapes=[pltpu.VMEM((B, 1), jnp.float32)] * 4,
            compiler_params=pltpu.CompilerParams(
                dimension_semantics=("arbitrary",)),
        )(c_scaled, x_all)

    return loss[0, 0], coefficients


# ------------------------------ pure-JAX reference ------------------------------
def _reference_forward(coefficients, x_fake_logsig, x_real_logsig, t=0.1):
    B = coefficients.shape[0]

    def empirical_cf(samples):
        ph = t * jnp.dot(coefficients, samples.T,
                         precision=jax.lax.Precision.HIGHEST)       # (B, N)
        return jnp.mean(jnp.cos(ph), axis=1), jnp.mean(jnp.sin(ph), axis=1)

    f_re, f_im = empirical_cf(x_fake_logsig)
    r_re, r_im = empirical_cf(x_real_logsig)
    d_re, d_im = f_re - r_re, f_im - r_im
    return -1.0 / B * jnp.sum(d_re ** 2 + d_im ** 2)


# -------------------------------------- main -------------------------------------
if __name__ == "__main__":
    batch_size = 8        # number of coefficient grid points
    path_dim = 4
    logsig_level = 2
    n_fake = 384          # fake log-signature samples
    n_real = 256          # real log-signature samples

    logsig_length = logsignature_channels(path_dim, logsig_level)   # = 10 for d=4

    key = jax.random.PRNGKey(0)
    k_coeff, k_fake, k_real = jax.random.split(key, 3)

    # nn.init.kaiming_normal_ on a (B, L) 2-D parameter: std = sqrt(2 / fan_in)
    coeff_std = math.sqrt(2.0 / logsig_length)
    coefficients = coeff_std * jax.random.normal(
        k_coeff, (batch_size, logsig_length), dtype=jnp.float32)

    # Synthetic log-signature samples driving the fake / real characteristic fns.
    x_fake = jax.random.normal(k_fake, (n_fake, logsig_length), dtype=jnp.float32)
    x_real = 0.8 * jax.random.normal(k_real, (n_real, logsig_length),
                                     dtype=jnp.float32) + 0.1

    d_loss, coeff_out = grid_characteristic_discriminator_forward(
        coefficients, x_fake, x_real, t=0.1)
    d_loss = jax.block_until_ready(d_loss)
    coeff_out = jax.block_until_ready(coeff_out)

    ref_loss = _reference_forward(coefficients, x_fake, x_real, t=0.1)
    assert jnp.allclose(d_loss, ref_loss, rtol=2e-4, atol=1e-6), (d_loss, ref_loss)
    assert coeff_out.shape == (batch_size, logsig_length)

    print("KERNEL_OK")
</pallas_src>

<mosaic_0001>
module attributes {stable_mosaic.version = 11 : i64} {
  func.func @_cf_loss_single_kernel(%arg0: i32, %arg1: memref<8x10xf32, #tpu.memory_space<vmem>>, %arg2: memref<10x640xf32, #tpu.memory_space<vmem>>, %arg3: memref<1x1xf32, #tpu.memory_space<vmem>>) attributes {dimension_semantics = [#tpu.dimension_semantics<arbitrary>], iteration_bounds = array<i64: 1>, scalar_prefetch = 0 : i64, scratch_operands = 0 : i64, tpu.core_type = #tpu.core_type<tc>, window_params = [{pipeline_mode = #tpu.pipeline_mode<synchronous>, transform_indices = @transform_0, window_bounds = array<i64: 8, 10>}, {pipeline_mode = #tpu.pipeline_mode<synchronous>, transform_indices = @transform_1, window_bounds = array<i64: 10, 640>}, {pipeline_mode = #tpu.pipeline_mode<synchronous>, transform_indices = @transform_2, window_bounds = array<i64: 1, 1>}]} {
    %c0 = arith.constant 0 : index
    %c0_0 = arith.constant 0 : index
    %0 = vector.load %arg1[%c0, %c0_0] : memref<8x10xf32, #tpu.memory_space<vmem>>, vector<8x10xf32>
    %c0_1 = arith.constant 0 : index
    %c0_2 = arith.constant 0 : index
    %1 = vector.load %arg2[%c0_1, %c0_2] : memref<10x640xf32, #tpu.memory_space<vmem>>, vector<10x640xf32>
    %cst = arith.constant dense<0.000000e+00> : vector<8x640xf32>
    %2 = tpu.matmul %0, %1, %cst {dimension_numbers = #tpu.dot_dimension_numbers<[1], [0], [0], [1], [0, 0, 1, 1], [], []>} : vector<8x10xf32>, vector<10x640xf32>, vector<8x640xf32> -> vector<8x640xf32>
    %3 = math.cos %2 : vector<8x640xf32>
    %4 = math.sin %2 : vector<8x640xf32>
    %5 = vector.extract_strided_slice %3 {offsets = [0, 0], sizes = [8, 384], strides = [1, 1]} : vector<8x640xf32> to vector<8x384xf32>
    %cst_3 = arith.constant dense<0.000000e+00> : vector<8xf32>
    %6 = vector.multi_reduction <add>, %5, %cst_3 [1] : vector<8x384xf32> to vector<8xf32>
    %7 = vector.shape_cast %6 : vector<8xf32> to vector<8x1xf32>
    %cst_4 = arith.constant 0.00260416674 : f32
    %8 = vector.broadcast %cst_4 : f32 to vector<8x1xf32>
    %9 = arith.mulf %7, %8 : vector<8x1xf32>
    %10 = vector.extract_strided_slice %4 {offsets = [0, 0], sizes = [8, 384], strides = [1, 1]} : vector<8x640xf32> to vector<8x384xf32>
    %cst_5 = arith.constant dense<0.000000e+00> : vector<8xf32>
    %11 = vector.multi_reduction <add>, %10, %cst_5 [1] : vector<8x384xf32> to vector<8xf32>
    %12 = vector.shape_cast %11 : vector<8xf32> to vector<8x1xf32>
    %cst_6 = arith.constant 0.00260416674 : f32
    %13 = vector.broadcast %cst_6 : f32 to vector<8x1xf32>
    %14 = arith.mulf %12, %13 : vector<8x1xf32>
    %15 = vector.extract_strided_slice %3 {offsets = [0, 384], sizes = [8, 256], strides = [1, 1]} : vector<8x640xf32> to vector<8x256xf32>
    %cst_7 = arith.constant dense<0.000000e+00> : vector<8xf32>
    %16 = vector.multi_reduction <add>, %15, %cst_7 [1] : vector<8x256xf32> to vector<8xf32>
    %17 = vector.shape_cast %16 : vector<8xf32> to vector<8x1xf32>
    %cst_8 = arith.constant 3.906250e-03 : f32
    %18 = vector.broadcast %cst_8 : f32 to vector<8x1xf32>
    %19 = arith.mulf %17, %18 : vector<8x1xf32>
    %20 = vector.extract_strided_slice %4 {offsets = [0, 384], sizes = [8, 256], strides = [1, 1]} : vector<8x640xf32> to vector<8x256xf32>
    %cst_9 = arith.constant dense<0.000000e+00> : vector<8xf32>
    %21 = vector.multi_reduction <add>, %20, %cst_9 [1] : vector<8x256xf32> to vector<8xf32>
    %22 = vector.shape_cast %21 : vector<8xf32> to vector<8x1xf32>
    %cst_10 = arith.constant 3.906250e-03 : f32
    %23 = vector.broadcast %cst_10 : f32 to vector<8x1xf32>
    %24 = arith.mulf %22, %23 : vector<8x1xf32>
    %25 = arith.subf %9, %19 : vector<8x1xf32>
    %26 = arith.subf %14, %24 : vector<8x1xf32>
    %27 = arith.mulf %25, %25 : vector<8x1xf32>
    %28 = arith.mulf %26, %26 : vector<8x1xf32>
    %29 = arith.addf %27, %28 : vector<8x1xf32>
    %cst_11 = arith.constant dense<0.000000e+00> : vector<1xf32>
    %30 = vector.multi_reduction <add>, %29, %cst_11 [0] : vector<8x1xf32> to vector<1xf32>
    %31 = vector.shape_cast %30 : vector<1xf32> to vector<1x1xf32>
    %cst_12 = arith.constant -1.250000e-01 : f32
    %32 = vector.broadcast %cst_12 : f32 to vector<1x1xf32>
    %33 = arith.mulf %32, %31 : vector<1x1xf32>
    %c0_13 = arith.constant 0 : index
    %c0_14 = arith.constant 0 : index
    %34 = vector.load %arg3[%c0_13, %c0_14] : memref<1x1xf32, #tpu.memory_space<vmem>>, vector<1x1xf32>
    tpu.vector_store %arg3[%c0_13, %c0_14], %33 {strides = array<i32>} : memref<1x1xf32, #tpu.memory_space<vmem>>, vector<1x1xf32>,
    return
  }
  func.func @transform_0(%arg0: i32) -> (i32, i32) {
    %c0_i32 = arith.constant 0 : i32
    %c0_i32_0 = arith.constant 0 : i32
    %c0_i32_1 = arith.constant 0 : i32
    return %c0_i32, %c0_i32_0 : i32, i32
  }
  func.func @transform_1(%arg0: i32) -> (i32, i32) {
    %c0_i32 = arith.constant 0 : i32
    %c0_i32_0 = arith.constant 0 : i32
    %c0_i32_1 = arith.constant 0 : i32
    return %c0_i32, %c0_i32_0 : i32, i32
  }
  func.func @transform_2(%arg0: i32) -> (i32, i32) {
    %c0_i32 = arith.constant 0 : i32
    %c0_i32_0 = arith.constant 0 : i32
    %c0_i32_1 = arith.constant 0 : i32
    return %c0_i32, %c0_i32_0 : i32, i32
  }
}

</mosaic_0001>

<llo_original>
// kernel: tpu_custom_call.1
$region0: #{tpu_custom_call.1}
  #allocation0 [shape = 'u32[]', space=smem, size = 0x4, offset = 0x4, fixed_abs, tag = 'smem constant byte address 0x4 - core index']
  #allocation1 [shape = 'u32[72,128]{1,0:T(1,128)}', space=vmem, size = 0x9000, scoped, tag = 'internal scratch']
  %s0 = inlined_call_operand.hbm [shape: f32[8,10], index: 0, kind: input, shape index: {}]
  %s1 = inlined_call_operand.hbm [shape: f32[10,640], index: 1, kind: input, shape index: {}]
  %s2 = inlined_call_operand.hbm [shape: f32[1,1], index: 2, kind: output, shape index: {}]
  %s3 = sld [smem:[#allocation0]]
  $region26: #{tpu_custom_call.1} parent=0
    _
  %s5 = ssub.s32 1, %s3
  %s6 = scalar_select 0, %s5, %s3
  $region1: #{tpu_custom_call.1} parent=0
    #allocation2 [shape = 'u8[4096]{0}', space=vmem, size = 0x1000, scoped, tag = 'input window, operand 0, single buffered']
    #allocation3 [shape = 's32[1]{0}', space=sflag, size = 0x4, scoped, tag = 'scoped memory for tpu_custom_call.1']
    #allocation4 [shape = 's32[1]{0}', space=sflag, size = 0x4, scoped, tag = 'scoped memory for tpu_custom_call.1']
    #allocation5 [shape = 'u8[40960]{0}', space=vmem, size = 0xa000, scoped, tag = 'input window, operand 1, single buffered']
    #allocation6 [shape = 's32[1]{0}', space=sflag, size = 0x4, scoped, tag = 'scoped memory for tpu_custom_call.1']
    #allocation7 [shape = 'u8[512]{0}', space=vmem, size = 0x400, scoped, tag = 'output window, operand 0, single buffered']
    %7 = vsyncpa [#allocation3], 0
    %8 = vsyncpa [#allocation6], 0
    %9 = vsyncpa [#allocation4], 0
    // Predicated region
    $region2: #{tpu_custom_call.1} parent=1 // pred_check
      _
    $region3: #{tpu_custom_call.1} parent=1 // pred_check_branch
      %11 = sbr.rel (0) target = $region5
    $region4: #{tpu_custom_call.1} parent=1 // pred_region
      %13 = vsyncadd [#allocation3], 0
      %s15 = sshll.u32 %s0, 4
      %s16 = int_to_ptr.hbm [resolvable:$true] %s15
      %s17 = sshll.u32 [#allocation2], 4
      %s18 = int_to_ptr.vmem [resolvable:$true] %s17
      %20 = dma.hbm_to_vmem [thread:$0]  %s16, 128, %s18, [#allocation3]
    $region5: #{tpu_custom_call.1} parent=1 // pred_fallthru
      _
    // Predicated region
    $region6: #{tpu_custom_call.1} parent=1 // pred_check
      _
    $region7: #{tpu_custom_call.1} parent=1 // pred_check_branch
      %22 = sbr.rel (0) target = $region9
    $region8: #{tpu_custom_call.1} parent=1 // pred_region
      %24 = vsyncadd [#allocation6], 0
      %s25 = sshll.u32 %s1, 4
      %s26 = int_to_ptr.hbm [resolvable:$true] %s25
      %s27 = sshll.u32 [#allocation5], 4
      %s28 = int_to_ptr.vmem [resolvable:$true] %s27
      %33 = dma.hbm_to_vmem [thread:$0]  %s26, 1280, %s28, [#allocation6], 640, 640, 40
    $region9: #{tpu_custom_call.1} parent=1 // pred_fallthru
      _
    // Predicated region
    $region10: #{tpu_custom_call.1} parent=1 // pred_check
      _
    $region11: #{tpu_custom_call.1} parent=1 // pred_check_branch
      %35 = sbr.rel (0) target = $region13
    $region12: #{tpu_custom_call.1} parent=1 // pred_region
      %37 = dma.done [#allocation3], 128
    $region13: #{tpu_custom_call.1} parent=1 // pred_fallthru
      _
    // Predicated region
    $region14: #{tpu_custom_call.1} parent=1 // pred_check
      _
    $region15: #{tpu_custom_call.1} parent=1 // pred_check_branch
      %39 = sbr.rel (0) target = $region17
    $region16: #{tpu_custom_call.1} parent=1 // pred_region
      %41 = dma.done [#allocation6], 1280
    $region17: #{tpu_custom_call.1} parent=1 // pred_fallthru
      _
    %v42 = vld [vmem:[#allocation2] sm:$0xff]
    %v43 = vld [vmem:[#allocation5] sm:$0xff]
    %v44 = vld [vmem:[#allocation5 + $0x8] sm:$0xff]
    %v45 = vld [vmem:[#allocation5 + $0x10] sm:$0xff]
    %v46 = vld [vmem:[#allocation5 + $0x18] sm:$0xff]
    %v47 = vld [vmem:[#allocation5 + $0x20] sm:$0xff]
    %v48 = vld [vmem:[#allocation5 + $0x28] sm:$0x3]
    %v49 = vld [vmem:[#allocation5 + $0x30] sm:$0x3]
    %v50 = vld [vmem:[#allocation5 + $0x38] sm:$0x3]
    %v51 = vld [vmem:[#allocation5 + $0x40] sm:$0x3]
    %v52 = vld [vmem:[#allocation5 + $0x48] sm:$0x3]
    %vm53 = vcmask 80896
    %v55 = vsel %vm53, %v42, 0
    %vm57 = vcmask 1041408
    %v59 = vsel %vm57, %v48, 0
    %v62 = vsel %vm57, %v49, 0
    %v65 = vsel %vm57, %v50, 0
    %v68 = vsel %vm57, %v51, 0
    %v71 = vsel %vm57, %v52, 0
    %73 = vmatpush.msra.mxu0 0.0
    %74 = vmatpush.msra.mxu0 0.0
    %75 = vmatpush.msra.mxu0 0.0
    %76 = vmatpush.msra.mxu0 0.0
    %77 = vmatpush.msra.mxu0 0.0
    %78 = vmatpush.msra.mxu0 0.0
    %79 = vmatpush.msra.mxu0 0.0
    %80 = vmatpush.msra.mxu0 0.0
    %81 = vmatpush.msra.mxu0 0.0
    %82 = vmatpush.msra.mxu0 0.0
    %83 = vmatpush.msra.mxu0 0.0
    %84 = vmatpush.msra.mxu0 0.0
    %85 = vmatpush.msra.mxu0 0.0
    %86 = vmatpush.msra.mxu0 0.0
    %87 = vmatpush.msra.mxu0 %v59
    %88 = vmatpush.msra.mxu0 %v43
    %89 = vmatmul.f32.gmra.mxu0 %v55
    %v90 = vpop.f32.mrf.mxu0
    %v91 = vadd.f32 0.0, %v90
    %92 = vdwg.mxu0
    %93 = vmatpush.msra.mxu0 0.0
    %94 = vmatpush.msra.mxu0 0.0
    %95 = vmatpush.msra.mxu0 0.0
    %96 = vmatpush.msra.mxu0 0.0
    %97 = vmatpush.msra.mxu0 0.0
    %98 = vmatpush.msra.mxu0 0.0
    %99 = vmatpush.msra.mxu0 0.0
    %100 = vmatpush.msra.mxu0 0.0
    %101 = vmatpush.msra.mxu0 0.0
    %102 = vmatpush.msra.mxu0 0.0
    %103 = vmatpush.msra.mxu0 0.0
    %104 = vmatpush.msra.mxu0 0.0
    %105 = vmatpush.msra.mxu0 0.0
    %106 = vmatpush.msra.mxu0 0.0
    %107 = vmatpush.msra.mxu0 %v62
    %108 = vmatpush.msra.mxu0 %v44
    %109 = vmatmul.f32.gmra.mxu0 %v55
    %v110 = vpop.f32.mrf.mxu0
    %v111 = vadd.f32 0.0, %v110
    %112 = vdwg.mxu0
    %113 = vmatpush.msra.mxu0 0.0
    %114 = vmatpush.msra.mxu0 0.0
    %115 = vmatpush.msra.mxu0 0.0
    %116 = vmatpush.msra.mxu0 0.0
    %117 = vmatpush.msra.mxu0 0.0
    %118 = vmatpush.msra.mxu0 0.0
    %119 = vmatpush.msra.mxu0 0.0
    %120 = vmatpush.msra.mxu0 0.0
    %121 = vmatpush.msra.mxu0 0.0
    %122 = vmatpush.msra.mxu0 0.0
    %123 = vmatpush.msra.mxu0 0.0
    %124 = vmatpush.msra.mxu0 0.0
    %125 = vmatpush.msra.mxu0 0.0
    %126 = vmatpush.msra.mxu0 0.0
    %127 = vmatpush.msra.mxu0 %v65
    %128 = vmatpush.msra.mxu0 %v45
    %129 = vmatmul.f32.gmra.mxu0 %v55
    %v130 = vpop.f32.mrf.mxu0
    %v131 = vadd.f32 0.0, %v130
    %132 = vdwg.mxu0
    %133 = vmatpush.msra.mxu0 0.0
    %134 = vmatpush.msra.mxu0 0.0
    %135 = vmatpush.msra.mxu0 0.0
    %136 = vmatpush.msra.mxu0 0.0
    %137 = vmatpush.msra.mxu0 0.0
    %138 = vmatpush.msra.mxu0 0.0
    %139 = vmatpush.msra.mxu0 0.0
    %140 = vmatpush.msra.mxu0 0.0
    %141 = vmatpush.msra.mxu0 0.0
    %142 = vmatpush.msra.mxu0 0.0
    %143 = vmatpush.msra.mxu0 0.0
    %144 = vmatpush.msra.mxu0 0.0
    %145 = vmatpush.msra.mxu0 0.0
    %146 = vmatpush.msra.mxu0 0.0
    %147 = vmatpush.msra.mxu0 %v68
    %148 = vmatpush.msra.mxu0 %v46
    %149 = vmatmul.f32.gmra.mxu0 %v55
    %v150 = vpop.f32.mrf.mxu0
    %v151 = vadd.f32 0.0, %v150
    %152 = vdwg.mxu0
    %153 = vmatpush.msra.mxu0 0.0
    %154 = vmatpush.msra.mxu0 0.0
    %155 = vmatpush.msra.mxu0 0.0
    %156 = vmatpush.msra.mxu0 0.0
    %157 = vmatpush.msra.mxu0 0.0
    %158 = vmatpush.msra.mxu0 0.0
    %159 = vmatpush.msra.mxu0 0.0
    %160 = vmatpush.msra.mxu0 0.0
    %161 = vmatpush.msra.mxu0 0.0
    %162 = vmatpush.msra.mxu0 0.0
    %163 = vmatpush.msra.mxu0 0.0
    %164 = vmatpush.msra.mxu0 0.0
    %165 = vmatpush.msra.mxu0 0.0
    %166 = vmatpush.msra.mxu0 0.0
    %167 = vmatpush.msra.mxu0 %v71
    %168 = vmatpush.msra.mxu0 %v47
    %169 = vmatmul.f32.gmra.mxu0 %v55
    %v170 = vpop.f32.mrf.mxu0
    %v171 = vadd.f32 0.0, %v170
    %172 = vdwg.mxu0
    %v173 = vand.u32 2147483647, %v91
    %vm174 = vcmp.le.f32.partialorder %v173, 0.7853982
    %vm175 = vcmp.lt.s32.totalorder %v91, 0
    %v176 = vand.u32 %v91, 2139095040
    %v177 = vshrl.u32 %v176, 23
    %v178 = vsub.s32 %v177, 127
    %v179 = vand.u32 2147483647, %v91
    %v180 = vand.u32 %v179, 8388607
    %v181 = vor.u32 %v180, 8388608
    %v182 = vsub.s32 0, %v181
    %v183 = vadd.s32 %v178, 1
    %vm184 = vcmp.gt.s32.totalorder %v183, 0
    %v185 = vsel %vm184, %v183, 0
    %v186 = vshrl.u32 %v185, 5
    %v187 = vand.u32 %v185, 31
    %v188 = vsub.s32 32, %v187
    %v189 = vshrl.u32 683565275, %v188
    %v190 = vshll.u32 683565275, %v187
    %v191 = vshrl.u32 2475754826, %v188
    %v192 = vor.u32 %v190, %v191
    %v193 = vshll.u32 2475754826, %v187
    %v194 = vshrl.u32 2131351028, %v188
    %v195 = vor.u32 %v193, %v194
    %v196 = vshll.u32 2131351028, %v187
    %v197 = vshrl.u32 2102212464, %v188
    %v198 = vor.u32 %v196, %v197
    %v199 = vshll.u32 2102212464, %v187
    %v200 = vshrl.u32 920167782, %v188
    %v201 = vor.u32 %v199, %v200
    %v202 = vshll.u32 920167782, %v187
    %v203 = vshrl.u32 1326507024, %v188
    %v204 = vor.u32 %v202, %v203
    %vm205 = vcmp.lt.s32.totalorder %v186, 1
    %vm206 = vcmp.lt.s32.totalorder %v186, 2
    %vm207 = vcmp.lt.s32.totalorder %v186, 3
    %vm208 = vcmp.lt.s32.totalorder %v186, 4
    %v209 = vsel %vm205, %v189, %v192
    %v210 = vsel %vm208, %v198, 2102212464
    %v211 = vsel %vm207, %v195, %v210
    %v212 = vsel %vm206, %v209, %v211
    %v213 = vsel %vm205, %v192, %v195
    %v214 = vsel %vm208, %v201, 920167782
    %v215 = vsel %vm207, %v198, %v214
    %v216 = vsel %vm206, %v213, %v215
    %v217 = vsel %vm205, %v195, %v198
    %v218 = vsel %vm208, %v204, 1326507024
    %v219 = vsel %vm207, %v201, %v218
    %v220 = vsel %vm206, %v217, %v219
    %v221 = vshll.u32 %v181, 8
    %v222 = vand.u32 %v221, 65535
    %v223 = vshrl.u32 %v221, 16
    %v224 = vand.u32 %v220, 65535
    %v225 = vshrl.u32 %v220, 16
    %v226 = vmul.u32 %v222, %v224
    %v227 = vmul.u32 %v222, %v225
    %v228 = vmul.u32 %v223, %v224
    %v229 = vmul.u32 %v223, %v225
    %v230 = vshll.u32 %v227, 16
    %v231 = vshrl.u32 %v227, 16
    %v232 = vshll.u32 %v228, 16
    %v233 = vshrl.u32 %v228, 16
    %vm234 = vc.u32 %v226, %v230
    %v235 = vsel %vm234, 1, 0
    %v236 = vadd.s32 %v226, %v230
    %v237 = vadd.s32 %v229, %v235
    %vm238 = vc.u32 %v236, %v232
    %v239 = vsel %vm238, 1, 0
    %v240 = vadd.s32 %v236, %v232
    %v241 = vadd.s32 %v237, %v239
    %v242 = vadd.s32 %v241, %v231
    %v243 = vadd.s32 %v242, %v233
    %v244 = vand.u32 %v221, 65535
    %v245 = vshrl.u32 %v221, 16
    %v246 = vand.u32 %v216, 65535
    %v247 = vshrl.u32 %v216, 16
    %v248 = vmul.u32 %v244, %v246
    %v249 = vmul.u32 %v244, %v247
    %v250 = vmul.u32 %v245, %v246
    %v251 = vmul.u32 %v245, %v247
    %v252 = vshll.u32 %v249, 16
    %v253 = vshrl.u32 %v249, 16
    %v254 = vshll.u32 %v250, 16
    %v255 = vshrl.u32 %v250, 16
    %vm256 = vc.u32 %v248, %v252
    %v257 = vsel %vm256, 1, 0
    %v258 = vadd.s32 %v248, %v252
    %v259 = vadd.s32 %v251, %v257
    %vm260 = vc.u32 %v258, %v254
    %v261 = vsel %vm260, 1, 0
    %v262 = vadd.s32 %v258, %v254
    %v263 = vadd.s32 %v259, %v261
    %v264 = vadd.s32 %v263, %v253
    %v265 = vadd.s32 %v264, %v255
    %v266 = vmul.u32 %v221, %v212
    %v267 = vadd.s32 %v243, %v262
    %vm268 = vc.u32 %v243, %v262
    %v269 = vadd.s32 %v265, 1
    %v270 = vsel %vm268, %v269, %v265
    %v271 = vadd.s32 %v266, %v270
    %v272 = vadd.s32 %v271, 536870912
    %v273 = vshrl.u32 %v272, 30
    %v274 = vshll.u32 %v273, 30
    %v275 = vsub.s32 %v271, %v274
    %vm276 = vcmp.lt.s32.totalorder %v275, 0
    %v277 = vsub.s32 0, %v275
    %v278 = vsel %vm276, %v277, %v275
    %v279 = vclz %v278
    %v280 = vsub.s32 %v279, 2
    %vm281 = vcmp.gt.s32.totalorder 0, %v280
    %v282 = vsel %vm281, 0, %v280
    %v283 = vsub.s32 32, %v282
    %v284 = vshll.u32 %v275, %v282
    %v285 = vshrl.u32 %v267, %v283
    %v286 = vor.u32 %v284, %v285
    %v287 = vsub.s32 4294967266, %v282
    %v288 = vadd.s32 %v287, 127
    %v289 = vshll.u32 %v288, 23
    %v290 = vor.u32 4788187, %v289
    %v291 = vand.u32 2147483647, %v290
    %v293 = vcvt.s32.f32 %v286
    %v294 = vmul.f32 %v293, %v291
    %v295 = vxor.u32 %v294, 2147483648
    %v296 = vsel %vm175, %v295, %v294
    %v297 = vsub.s32 4, %v273
    %v298 = vsel %vm175, %v297, %v273
    %v299 = vsel %vm174, %v91, %v296
    %v300 = vsel %vm174, 0, %v298
    %v301 = vmul.f32 %v299, %v299
    %v302 = vmul.f32 %v301, -0.001358992
    %v303 = vadd.f32 %v302, 0.041655596
    %v304 = vmul.f32 %v301, %v303
    %v305 = vadd.f32 %v304, -0.4999988
    %v306 = vmul.f32 %v301, %v305
    %v307 = vadd.f32 1.0, %v306
    %v308 = vmul.f32 %v299, %v299
    %v309 = vmul.f32 %v308, -0.00019511016
    %v310 = vadd.f32 %v309, 0.008332121
    %v311 = vmul.f32 %v308, %v310
    %v312 = vadd.f32 %v311, -0.16666654
    %v313 = vmul.f32 %v308, %v312
    %v314 = vadd.f32 %v313, 1.0
    %v315 = vmul.f32 %v314, %v299
    %vm316 = vweird.f32 %v91
    %v317 = vand.u32 %v300, 3
    %vm318 = vcmp.lt.s32.totalorder %v317, 2
    %vm319 = vcmp.eq.s32.totalorder %v317, 0
    %v320 = vxor.u32 %v315, 2147483648
    %v321 = vsel %vm319, %v307, %v320
    %vm322 = vcmp.eq.s32.totalorder %v317, 2
    %v323 = vxor.u32 %v307, 2147483648
    %v324 = vsel %vm322, %v323, %v315
    %v325 = vsel %vm318, %v321, %v324
    %v326 = vsel %vm316, nan, %v325
    %v327 = vand.u32 2147483647, %v111
    %vm328 = vcmp.le.f32.partialorder %v327, 0.7853982
    %vm329 = vcmp.lt.s32.totalorder %v111, 0
    %v330 = vand.u32 %v111, 2139095040
    %v331 = vshrl.u32 %v330, 23
    %v332 = vsub.s32 %v331, 127
    %v333 = vand.u32 2147483647, %v111
    %v334 = vand.u32 %v333, 8388607
    %v335 = vor.u32 %v334, 8388608
    %v336 = vsub.s32 0, %v335
    %v337 = vadd.s32 %v332, 1
    %vm338 = vcmp.gt.s32.totalorder %v337, 0
    %v339 = vsel %vm338, %v337, 0
    %v340 = vshrl.u32 %v339, 5
    %v341 = vand.u32 %v339, 31
    %v342 = vsub.s32 32, %v341
    %v343 = vshrl.u32 683565275, %v342
    %v344 = vshll.u32 683565275, %v341
    %v345 = vshrl.u32 2475754826, %v342
    %v346 = vor.u32 %v344, %v345
    %v347 = vshll.u32 2475754826, %v341
    %v348 = vshrl.u32 2131351028, %v342
    %v349 = vor.u32 %v347, %v348
    %v350 = vshll.u32 2131351028, %v341
    %v351 = vshrl.u32 2102212464, %v342
    %v352 = vor.u32 %v350, %v351
    %v353 = vshll.u32 2102212464, %v341
    %v354 = vshrl.u32 920167782, %v342
    %v355 = vor.u32 %v353, %v354
    %v356 = vshll.u32 920167782, %v341
    %v357 = vshrl.u32 1326507024, %v342
    %v358 = vor.u32 %v356, %v357
    %vm359 = vcmp.lt.s32.totalorder %v340, 1
    %vm360 = vcmp.lt.s32.totalorder %v340, 2
    %vm361 = vcmp.lt.s32.totalorder %v340, 3
    %vm362 = vcmp.lt.s32.totalorder %v340, 4
    %v363 = vsel %vm359, %v343, %v346
    %v364 = vsel %vm362, %v352, 2102212464
    %v365 = vsel %vm361, %v349, %v364
    %v366 = vsel %vm360, %v363, %v365
    %v367 = vsel %vm359, %v346, %v349
    %v368 = vsel %vm362, %v355, 920167782
    %v369 = vsel %vm361, %v352, %v368
    %v370 = vsel %vm360, %v367, %v369
    %v371 = vsel %vm359, %v349, %v352
    %v372 = vsel %vm362, %v358, 1326507024
    %v373 = vsel %vm361, %v355, %v372
    %v374 = vsel %vm360, %v371, %v373
    %v375 = vshll.u32 %v335, 8
    %v376 = vand.u32 %v375, 65535
    %v377 = vshrl.u32 %v375, 16
    %v378 = vand.u32 %v374, 65535
    %v379 = vshrl.u32 %v374, 16
    %v380 = vmul.u32 %v376, %v378
    %v381 = vmul.u32 %v376, %v379
    %v382 = vmul.u32 %v377, %v378
    %v383 = vmul.u32 %v377, %v379
    %v384 = vshll.u32 %v381, 16
    %v385 = vshrl.u32 %v381, 16
    %v386 = vshll.u32 %v382, 16
    %v387 = vshrl.u32 %v382, 16
    %vm388 = vc.u32 %v380, %v384
    %v389 = vsel %vm388, 1, 0
    %v390 = vadd.s32 %v380, %v384
    %v391 = vadd.s32 %v383, %v389
    %vm392 = vc.u32 %v390, %v386
    %v393 = vsel %vm392, 1, 0
    %v394 = vadd.s32 %v390, %v386
    %v395 = vadd.s32 %v391, %v393
    %v396 = vadd.s32 %v395, %v385
    %v397 = vadd.s32 %v396, %v387
    %v398 = vand.u32 %v375, 65535
    %v399 = vshrl.u32 %v375, 16
    %v400 = vand.u32 %v370, 65535
    %v401 = vshrl.u32 %v370, 16
    %v402 = vmul.u32 %v398, %v400
    %v403 = vmul.u32 %v398, %v401
    %v404 = vmul.u32 %v399, %v400
    %v405 = vmul.u32 %v399, %v401
    %v406 = vshll.u32 %v403, 16
    %v407 = vshrl.u32 %v403, 16
    %v408 = vshll.u32 %v404, 16
    %v409 = vshrl.u32 %v404, 16
    %vm410 = vc.u32 %v402, %v406
    %v411 = vsel %vm410, 1, 0
    %v412 = vadd.s32 %v402, %v406
    %v413 = vadd.s32 %v405, %v411
    %vm414 = vc.u32 %v412, %v408
    %v415 = vsel %vm414, 1, 0
    %v416 = vadd.s32 %v412, %v408
    %v417 = vadd.s32 %v413, %v415
    %v418 = vadd.s32 %v417, %v407
    %v419 = vadd.s32 %v418, %v409
    %v420 = vmul.u32 %v375, %v366
    %v421 = vadd.s32 %v397, %v416
    %vm422 = vc.u32 %v397, %v416
    %v423 = vadd.s32 %v419, 1
    %v424 = vsel %vm422, %v423, %v419
    %v425 = vadd.s32 %v420, %v424
    %v426 = vadd.s32 %v425, 536870912
    %v427 = vshrl.u32 %v426, 30
    %v428 = vshll.u32 %v427, 30
    %v429 = vsub.s32 %v425, %v428
    %vm430 = vcmp.lt.s32.totalorder %v429, 0
    %v431 = vsub.s32 0, %v429
    %v432 = vsel %vm430, %v431, %v429
    %v433 = vclz %v432
    %v434 = vsub.s32 %v433, 2
    %vm435 = vcmp.gt.s32.totalorder 0, %v434
    %v436 = vsel %vm435, 0, %v434
    %v437 = vsub.s32 32, %v436
    %v438 = vshll.u32 %v429, %v436
    %v439 = vshrl.u32 %v421, %v437
    %v440 = vor.u32 %v438, %v439
    %v441 = vsub.s32 4294967266, %v436
    %v442 = vadd.s32 %v441, 127
    %v443 = vshll.u32 %v442, 23
    %v444 = vor.u32 4788187, %v443
    %v445 = vand.u32 2147483647, %v444
    %v447 = vcvt.s32.f32 %v440
    %v448 = vmul.f32 %v447, %v445
    %v449 = vxor.u32 %v448, 2147483648
    %v450 = vsel %vm329, %v449, %v448
    %v451 = vsub.s32 4, %v427
    %v452 = vsel %vm329, %v451, %v427
    %v453 = vsel %vm328, %v111, %v450
    %v454 = vsel %vm328, 0, %v452
    %v455 = vmul.f32 %v453, %v453
    %v456 = vmul.f32 %v455, -0.001358992
    %v457 = vadd.f32 %v456, 0.041655596
    %v458 = vmul.f32 %v455, %v457
    %v459 = vadd.f32 %v458, -0.4999988
    %v460 = vmul.f32 %v455, %v459
    %v461 = vadd.f32 1.0, %v460
    %v462 = vmul.f32 %v453, %v453
    %v463 = vmul.f32 %v462, -0.00019511016
    %v464 = vadd.f32 %v463, 0.008332121
    %v465 = vmul.f32 %v462, %v464
    %v466 = vadd.f32 %v465, -0.16666654
    %v467 = vmul.f32 %v462, %v466
    %v468 = vadd.f32 %v467, 1.0
    %v469 = vmul.f32 %v468, %v453
    %vm470 = vweird.f32 %v111
    %v471 = vand.u32 %v454, 3
    %vm472 = vcmp.lt.s32.totalorder %v471, 2
    %vm473 = vcmp.eq.s32.totalorder %v471, 0
    %v474 = vxor.u32 %v469, 2147483648
    %v475 = vsel %vm473, %v461, %v474
    %vm476 = vcmp.eq.s32.totalorder %v471, 2
    %v477 = vxor.u32 %v461, 2147483648
    %v478 = vsel %vm476, %v477, %v469
    %v479 = vsel %vm472, %v475, %v478
    %v480 = vsel %vm470, nan, %v479
    %v481 = vand.u32 2147483647, %v131
    %vm482 = vcmp.le.f32.partialorder %v481, 0.7853982
    %vm483 = vcmp.lt.s32.totalorder %v131, 0
    %v484 = vand.u32 %v131, 2139095040
    %v485 = vshrl.u32 %v484, 23
    %v486 = vsub.s32 %v485, 127
    %v487 = vand.u32 2147483647, %v131
    %v488 = vand.u32 %v487, 8388607
    %v489 = vor.u32 %v488, 8388608
    %v490 = vsub.s32 0, %v489
    %v491 = vadd.s32 %v486, 1
    %vm492 = vcmp.gt.s32.totalorder %v491, 0
    %v493 = vsel %vm492, %v491, 0
    %v494 = vshrl.u32 %v493, 5
    %v495 = vand.u32 %v493, 31
    %v496 = vsub.s32 32, %v495
    %v497 = vshrl.u32 683565275, %v496
    %v498 = vshll.u32 683565275, %v495
    %v499 = vshrl.u32 2475754826, %v496
    %v500 = vor.u32 %v498, %v499
    %v501 = vshll.u32 2475754826, %v495
    %v502 = vshrl.u32 2131351028, %v496
    %v503 = vor.u32 %v501, %v502
    %v504 = vshll.u32 2131351028, %v495
    %v505 = vshrl.u32 2102212464, %v496
    %v506 = vor.u32 %v504, %v505
    %v507 = vshll.u32 2102212464, %v495
    %v508 = vshrl.u32 920167782, %v496
    %v509 = vor.u32 %v507, %v508
    %v510 = vshll.u32 920167782, %v495
    %v511 = vshrl.u32 1326507024, %v496
    %v512 = vor.u32 %v510, %v511
    %vm513 = vcmp.lt.s32.totalorder %v494, 1
    %vm514 = vcmp.lt.s32.totalorder %v494, 2
    %vm515 = vcmp.lt.s32.totalorder %v494, 3
    %vm516 = vcmp.lt.s32.totalorder %v494, 4
    %v517 = vsel %vm513, %v497, %v500
    %v518 = vsel %vm516, %v506, 2102212464
    %v519 = vsel %vm515, %v503, %v518
    %v520 = vsel %vm514, %v517, %v519
    %v521 = vsel %vm513, %v500, %v503
    %v522 = vsel %vm516, %v509, 920167782
    %v523 = vsel %vm515, %v506, %v522
    %v524 = vsel %vm514, %v521, %v523
    %v525 = vsel %vm513, %v503, %v506
    %v526 = vsel %vm516, %v512, 1326507024
    %v527 = vsel %vm515, %v509, %v526
    %v528 = vsel %vm514, %v525, %v527
    %v529 = vshll.u32 %v489, 8
    %v530 = vand.u32 %v529, 65535
    %v531 = vshrl.u32 %v529, 16
    %v532 = vand.u32 %v528, 65535
    %v533 = vshrl.u32 %v528, 16
    %v534 = vmul.u32 %v530, %v532
    %v535 = vmul.u32 %v530, %v533
    %v536 = vmul.u32 %v531, %v532
    %v537 = vmul.u32 %v531, %v533
    %v538 = vshll.u32 %v535, 16
    %v539 = vshrl.u32 %v535, 16
    %v540 = vshll.u32 %v536, 16
    %v541 = vshrl.u32 %v536, 16
    %vm542 = vc.u32 %v534, %v538
    %v543 = vsel %vm542, 1, 0
    %v544 = vadd.s32 %v534, %v538
    %v545 = vadd.s32 %v537, %v543
    %vm546 = vc.u32 %v544, %v540
    %v547 = vsel %vm546, 1, 0
    %v548 = vadd.s32 %v544, %v540
    %v549 = vadd.s32 %v545, %v547
    %v550 = vadd.s32 %v549, %v539
    %v551 = vadd.s32 %v550, %v541
    %v552 = vand.u32 %v529, 65535
    %v553 = vshrl.u32 %v529, 16
    %v554 = vand.u32 %v524, 65535
    %v555 = vshrl.u32 %v524, 16
    %v556 = vmul.u32 %v552, %v554
    %v557 = vmul.u32 %v552, %v555
    %v558 = vmul.u32 %v553, %v554
    %v559 = vmul.u32 %v553, %v555
    %v560 = vshll.u32 %v557, 16
    %v561 = vshrl.u32 %v557, 16
    %v562 = vshll.u32 %v558, 16
    %v563 = vshrl.u32 %v558, 16
    %vm564 = vc.u32 %v556, %v560
    %v565 = vsel %vm564, 1, 0
    %v566 = vadd.s32 %v556, %v560
    %v567 = vadd.s32 %v559, %v565
    %vm568 = vc.u32 %v566, %v562
    %v569 = vsel %vm568, 1, 0
    %v570 = vadd.s32 %v566, %v562
    %v571 = vadd.s32 %v567, %v569
    %v572 = vadd.s32 %v571, %v561
    %v573 = vadd.s32 %v572, %v563
    %v574 = vmul.u32 %v529, %v520
    %v575 = vadd.s32 %v551, %v570
    %vm576 = vc.u32 %v551, %v570
    %v577 = vadd.s32 %v573, 1
    %v578 = vsel %vm576, %v577, %v573
    %v579 = vadd.s32 %v574, %v578
    %v580 = vadd.s32 %v579, 536870912
    %v581 = vshrl.u32 %v580, 30
    %v582 = vshll.u32 %v581, 30
    %v583 = vsub.s32 %v579, %v582
    %vm584 = vcmp.lt.s32.totalorder %v583, 0
    %v585 = vsub.s32 0, %v583
    %v586 = vsel %vm584, %v585, %v583
    %v587 = vclz %v586
    %v588 = vsub.s32 %v587, 2
    %vm589 = vcmp.gt.s32.totalorder 0, %v588
    %v590 = vsel %vm589, 0, %v588
    %v591 = vsub.s32 32, %v590
    %v592 = vshll.u32 %v583, %v590
    %v593 = vshrl.u32 %v575, %v591
    %v594 = vor.u32 %v592, %v593
    %v595 = vsub.s32 4294967266, %v590
    %v596 = vadd.s32 %v595, 127
    %v597 = vshll.u32 %v596, 23
    %v598 = vor.u32 4788187, %v597
    %v599 = vand.u32 2147483647, %v598
    %v601 = vcvt.s32.f32 %v594
    %v602 = vmul.f32 %v601, %v599
    %v603 = vxor.u32 %v602, 2147483648
    %v604 = vsel %vm483, %v603, %v602
    %v605 = vsub.s32 4, %v581
    %v606 = vsel %vm483, %v605, %v581
    %v607 = vsel %vm482, %v131, %v604
    %v608 = vsel %vm482, 0, %v606
    %v609 = vmul.f32 %v607, %v607
    %v610 = vmul.f32 %v609, -0.001358992
    %v611 = vadd.f32 %v610, 0.041655596
    %v612 = vmul.f32 %v609, %v611
    %v613 = vadd.f32 %v612, -0.4999988
    %v614 = vmul.f32 %v609, %v613
    %v615 = vadd.f32 1.0, %v614
    %v616 = vmul.f32 %v607, %v607
    %v617 = vmul.f32 %v616, -0.00019511016
    %v618 = vadd.f32 %v617, 0.008332121
    %v619 = vmul.f32 %v616, %v618
    %v620 = vadd.f32 %v619, -0.16666654
    %v621 = vmul.f32 %v616, %v620
    %v622 = vadd.f32 %v621, 1.0
    %v623 = vmul.f32 %v622, %v607
    %vm624 = vweird.f32 %v131
    %v625 = vand.u32 %v608, 3
    %vm626 = vcmp.lt.s32.totalorder %v625, 2
    %vm627 = vcmp.eq.s32.totalorder %v625, 0
    %v628 = vxor.u32 %v623, 2147483648
    %v629 = vsel %vm627, %v615, %v628
    %vm630 = vcmp.eq.s32.totalorder %v625, 2
    %v631 = vxor.u32 %v615, 2147483648
    %v632 = vsel %vm630, %v631, %v623
    %v633 = vsel %vm626, %v629, %v632
    %v634 = vsel %vm624, nan, %v633
    %v635 = vand.u32 2147483647, %v151
    %vm636 = vcmp.le.f32.partialorder %v635, 0.7853982
    %vm637 = vcmp.lt.s32.totalorder %v151, 0
    %v638 = vand.u32 %v151, 2139095040
    %v639 = vshrl.u32 %v638, 23
    %v640 = vsub.s32 %v639, 127
    %v641 = vand.u32 2147483647, %v151
    %v642 = vand.u32 %v641, 8388607
    %v643 = vor.u32 %v642, 8388608
    %v644 = vsub.s32 0, %v643
    %v645 = vadd.s32 %v640, 1
    %vm646 = vcmp.gt.s32.totalorder %v645, 0
    %v647 = vsel %vm646, %v645, 0
    %v648 = vshrl.u32 %v647, 5
    %v649 = vand.u32 %v647, 31
    %v650 = vsub.s32 32, %v649
    %v651 = vshrl.u32 683565275, %v650
    %v652 = vshll.u32 683565275, %v649
    %v653 = vshrl.u32 2475754826, %v650
    %v654 = vor.u32 %v652, %v653
    %v655 = vshll.u32 2475754826, %v649
    %v656 = vshrl.u32 2131351028, %v650
    %v657 = vor.u32 %v655, %v656
    %v658 = vshll.u32 2131351028, %v649
    %v659 = vshrl.u32 2102212464, %v650
    %v660 = vor.u32 %v658, %v659
    %v661 = vshll.u32 2102212464, %v649
    %v662 = vshrl.u32 920167782, %v650
    %v663 = vor.u32 %v661, %v662
    %v664 = vshll.u32 920167782, %v649
    %v665 = vshrl.u32 1326507024, %v650
    %v666 = vor.u32 %v664, %v665
    %vm667 = vcmp.lt.s32.totalorder %v648, 1
    %vm668 = vcmp.lt.s32.totalorder %v648, 2
    %vm669 = vcmp.lt.s32.totalorder %v648, 3
    %vm670 = vcmp.lt.s32.totalorder %v648, 4
    %v671 = vsel %vm667, %v651, %v654
    %v672 = vsel %vm670, %v660, 2102212464
    %v673 = vsel %vm669, %v657, %v672
    %v674 = vsel %vm668, %v671, %v673
    %v675 = vsel %vm667, %v654, %v657
    %v676 = vsel %vm670, %v663, 920167782
    %v677 = vsel %vm669, %v660, %v676
    %v678 = vsel %vm668, %v675, %v677
    %v679 = vsel %vm667, %v657, %v660
    %v680 = vsel %vm670, %v666, 1326507024
    %v681 = vsel %vm669, %v663, %v680
    %v682 = vsel %vm668, %v679, %v681
    %v683 = vshll.u32 %v643, 8
    %v684 = vand.u32 %v683, 65535
    %v685 = vshrl.u32 %v683, 16
    %v686 = vand.u32 %v682, 65535
    %v687 = vshrl.u32 %v682, 16
    %v688 = vmul.u32 %v684, %v686
    %v689 = vmul.u32 %v684, %v687
    %v690 = vmul.u32 %v685, %v686
    %v691 = vmul.u32 %v685, %v687
    %v692 = vshll.u32 %v689, 16
    %v693 = vshrl.u32 %v689, 16
    %v694 = vshll.u32 %v690, 16
    %v695 = vshrl.u32 %v690, 16
    %vm696 = vc.u32 %v688, %v692
    %v697 = vsel %vm696, 1, 0
    %v698 = vadd.s32 %v688, %v692
    %v699 = vadd.s32 %v691, %v697
    %vm700 = vc.u32 %v698, %v694
    %v701 = vsel %vm700, 1, 0
    %v702 = vadd.s32 %v698, %v694
    %v703 = vadd.s32 %v699, %v701
    %v704 = vadd.s32 %v703, %v693
    %v705 = vadd.s32 %v704, %v695
    %v706 = vand.u32 %v683, 65535
    %v707 = vshrl.u32 %v683, 16
    %v708 = vand.u32 %v678, 65535
    %v709 = vshrl.u32 %v678, 16
    %v710 = vmul.u32 %v706, %v708
    %v711 = vmul.u32 %v706, %v709
    %v712 = vmul.u32 %v707, %v708
    %v713 = vmul.u32 %v707, %v709
    %v714 = vshll.u32 %v711, 16
    %v715 = vshrl.u32 %v711, 16
    %v716 = vshll.u32 %v712, 16
    %v717 = vshrl.u32 %v712, 16
    %vm718 = vc.u32 %v710, %v714
    %v719 = vsel %vm718, 1, 0
    %v720 = vadd.s32 %v710, %v714
    %v721 = vadd.s32 %v713, %v719
    %vm722 = vc.u32 %v720, %v716
    %v723 = vsel %vm722, 1, 0
    %v724 = vadd.s32 %v720, %v716
    %v725 = vadd.s32 %v721, %v723
    %v726 = vadd.s32 %v725, %v715
    %v727 = vadd.s32 %v726, %v717
    %v728 = vmul.u32 %v683, %v674
    %v729 = vadd.s32 %v705, %v724
    %vm730 = vc.u32 %v705, %v724
    %v731 = vadd.s32 %v727, 1
    %v732 = vsel %vm730, %v731, %v727
    %v733 = vadd.s32 %v728, %v732
    %v734 = vadd.s32 %v733, 536870912
    %v735 = vshrl.u32 %v734, 30
    %v736 = vshll.u32 %v735, 30
    %v737 = vsub.s32 %v733, %v736
    %vm738 = vcmp.lt.s32.totalorder %v737, 0
    %v739 = vsub.s32 0, %v737
    %v740 = vsel %vm738, %v739, %v737
    %v741 = vclz %v740
    %v742 = vsub.s32 %v741, 2
    %vm743 = vcmp.gt.s32.totalorder 0, %v742
    %v744 = vsel %vm743, 0, %v742
    %v745 = vsub.s32 32, %v744
    %v746 = vshll.u32 %v737, %v744
    %v747 = vshrl.u32 %v729, %v745
    %v748 = vor.u32 %v746, %v747
    %v749 = vsub.s32 4294967266, %v744
    %v750 = vadd.s32 %v749, 127
    %v751 = vshll.u32 %v750, 23
    %v752 = vor.u32 4788187, %v751
    %v753 = vand.u32 2147483647, %v752
    %v755 = vcvt.s32.f32 %v748
    %v756 = vmul.f32 %v755, %v753
    %v757 = vxor.u32 %v756, 2147483648
    %v758 = vsel %vm637, %v757, %v756
    %v759 = vsub.s32 4, %v735
    %v760 = vsel %vm637, %v759, %v735
    %v761 = vsel %vm636, %v151, %v758
    %v762 = vsel %vm636, 0, %v760
    %v763 = vmul.f32 %v761, %v761
    %v764 = vmul.f32 %v763, -0.001358992
    %v765 = vadd.f32 %v764, 0.041655596
    %v766 = vmul.f32 %v763, %v765
    %v767 = vadd.f32 %v766, -0.4999988
    %v768 = vmul.f32 %v763, %v767
    %v769 = vadd.f32 1.0, %v768
    %v770 = vmul.f32 %v761, %v761
    %v771 = vmul.f32 %v770, -0.00019511016
    %v772 = vadd.f32 %v771, 0.008332121
    %v773 = vmul.f32 %v770, %v772
    %v774 = vadd.f32 %v773, -0.16666654
    %v775 = vmul.f32 %v770, %v774
    %v776 = vadd.f32 %v775, 1.0
    %v777 = vmul.f32 %v776, %v761
    %vm778 = vweird.f32 %v151
    %v779 = vand.u32 %v762, 3
    %vm780 = vcmp.lt.s32.totalorder %v779, 2
    %vm781 = vcmp.eq.s32.totalorder %v779, 0
    %v782 = vxor.u32 %v777, 2147483648
    %v783 = vsel %vm781, %v769, %v782
    %vm784 = vcmp.eq.s32.totalorder %v779, 2
    %v785 = vxor.u32 %v769, 2147483648
    %v786 = vsel %vm784, %v785, %v777
    %v787 = vsel %vm780, %v783, %v786
    %v788 = vsel %vm778, nan, %v787
    %v789 = vand.u32 2147483647, %v171
    %vm790 = vcmp.le.f32.partialorder %v789, 0.7853982
    %vm791 = vcmp.lt.s32.totalorder %v171, 0
    %v792 = vand.u32 %v171, 2139095040
    %v793 = vshrl.u32 %v792, 23
    %v794 = vsub.s32 %v793, 127
    %v795 = vand.u32 2147483647, %v171
    %v796 = vand.u32 %v795, 8388607
    %v797 = vor.u32 %v796, 8388608
    %v798 = vsub.s32 0, %v797
    %v799 = vadd.s32 %v794, 1
    %vm800 = vcmp.gt.s32.totalorder %v799, 0
    %v801 = vsel %vm800, %v799, 0
    %v802 = vshrl.u32 %v801, 5
    %v803 = vand.u32 %v801, 31
    %v804 = vsub.s32 32, %v803
    %v805 = vshrl.u32 683565275, %v804
    %v806 = vshll.u32 683565275, %v803
    %v807 = vshrl.u32 2475754826, %v804
    %v808 = vor.u32 %v806, %v807
    %v809 = vshll.u32 2475754826, %v803
    %v810 = vshrl.u32 2131351028, %v804
    %v811 = vor.u32 %v809, %v810
    %v812 = vshll.u32 2131351028, %v803
    %v813 = vshrl.u32 2102212464, %v804
    %v814 = vor.u32 %v812, %v813
    %v815 = vshll.u32 2102212464, %v803
    %v816 = vshrl.u32 920167782, %v804
    %v817 = vor.u32 %v815, %v816
    %v818 = vshll.u32 920167782, %v803
    %v819 = vshrl.u32 1326507024, %v804
    %v820 = vor.u32 %v818, %v819
    %vm821 = vcmp.lt.s32.totalorder %v802, 1
    %vm822 = vcmp.lt.s32.totalorder %v802, 2
    %vm823 = vcmp.lt.s32.totalorder %v802, 3
    %vm824 = vcmp.lt.s32.totalorder %v802, 4
    %v825 = vsel %vm821, %v805, %v808
    %v826 = vsel %vm824, %v814, 2102212464
    %v827 = vsel %vm823, %v811, %v826
    %v828 = vsel %vm822, %v825, %v827
    %v829 = vsel %vm821, %v808, %v811
    %v830 = vsel %vm824, %v817, 920167782
    %v831 = vsel %vm823, %v814, %v830
    %v832 = vsel %vm822, %v829, %v831
    %v833 = vsel %vm821, %v811, %v814
    %v834 = vsel %vm824, %v820, 1326507024
    %v835 = vsel %vm823, %v817, %v834
    %v836 = vsel %vm822, %v833, %v835
    %v837 = vshll.u32 %v797, 8
    %v838 = vand.u32 %v837, 65535
    %v839 = vshrl.u32 %v837, 16
    %v840 = vand.u32 %v836, 65535
    %v841 = vshrl.u32 %v836, 16
    %v842 = vmul.u32 %v838, %v840
    %v843 = vmul.u32 %v838, %v841
    %v844 = vmul.u32 %v839, %v840
    %v845 = vmul.u32 %v839, %v841
    %v846 = vshll.u32 %v843, 16
    %v847 = vshrl.u32 %v843, 16
    %v848 = vshll.u32 %v844, 16
    %v849 = vshrl.u32 %v844, 16
    %vm850 = vc.u32 %v842, %v846
    %v851 = vsel %vm850, 1, 0
    %v852 = vadd.s32 %v842, %v846
    %v853 = vadd.s32 %v845, %v851
    %vm854 = vc.u32 %v852, %v848
    %v855 = vsel %vm854, 1, 0
    %v856 = vadd.s32 %v852, %v848
    %v857 = vadd.s32 %v853, %v855
    %v858 = vadd.s32 %v857, %v847
    %v859 = vadd.s32 %v858, %v849
    %v860 = vand.u32 %v837, 65535
    %v861 = vshrl.u32 %v837, 16
    %v862 = vand.u32 %v832, 65535
    %v863 = vshrl.u32 %v832, 16
    %v864 = vmul.u32 %v860, %v862
    %v865 = vmul.u32 %v860, %v863
    %v866 = vmul.u32 %v861, %v862
    %v867 = vmul.u32 %v861, %v863
    %v868 = vshll.u32 %v865, 16
    %v869 = vshrl.u32 %v865, 16
    %v870 = vshll.u32 %v866, 16
    %v871 = vshrl.u32 %v866, 16
    %vm872 = vc.u32 %v864, %v868
    %v873 = vsel %vm872, 1, 0
    %v874 = vadd.s32 %v864, %v868
    %v875 = vadd.s32 %v867, %v873
    %vm876 = vc.u32 %v874, %v870
    %v877 = vsel %vm876, 1, 0
    %v878 = vadd.s32 %v874, %v870
    %v879 = vadd.s32 %v875, %v877
    %v880 = vadd.s32 %v879, %v869
    %v881 = vadd.s32 %v880, %v871
    %v882 = vmul.u32 %v837, %v828
    %v883 = vadd.s32 %v859, %v878
    %vm884 = vc.u32 %v859, %v878
    %v885 = vadd.s32 %v881, 1
    %v886 = vsel %vm884, %v885, %v881
    %v887 = vadd.s32 %v882, %v886
    %v888 = vadd.s32 %v887, 536870912
    %v889 = vshrl.u32 %v888, 30
    %v890 = vshll.u32 %v889, 30
    %v891 = vsub.s32 %v887, %v890
    %vm892 = vcmp.lt.s32.totalorder %v891, 0
    %v893 = vsub.s32 0, %v891
    %v894 = vsel %vm892, %v893, %v891
    %v895 = vclz %v894
    %v896 = vsub.s32 %v895, 2
    %vm897 = vcmp.gt.s32.totalorder 0, %v896
    %v898 = vsel %vm897, 0, %v896
    %v899 = vsub.s32 32, %v898
    %v900 = vshll.u32 %v891, %v898
    %v901 = vshrl.u32 %v883, %v899
    %v902 = vor.u32 %v900, %v901
    %v903 = vsub.s32 4294967266, %v898
    %v904 = vadd.s32 %v903, 127
    %v905 = vshll.u32 %v904, 23
    %v906 = vor.u32 4788187, %v905
    %v907 = vand.u32 2147483647, %v906
    %v909 = vcvt.s32.f32 %v902
    %v910 = vmul.f32 %v909, %v907
    %v911 = vxor.u32 %v910, 2147483648
    %v912 = vsel %vm791, %v911, %v910
    %v913 = vsub.s32 4, %v889
    %v914 = vsel %vm791, %v913, %v889
    %v915 = vsel %vm790, %v171, %v912
    %v916 = vsel %vm790, 0, %v914
    %v917 = vmul.f32 %v915, %v915
    %v918 = vmul.f32 %v917, -0.001358992
    %v919 = vadd.f32 %v918, 0.041655596
    %v920 = vmul.f32 %v917, %v919
    %v921 = vadd.f32 %v920, -0.4999988
    %v922 = vmul.f32 %v917, %v921
    %v923 = vadd.f32 1.0, %v922
    %v924 = vmul.f32 %v915, %v915
    %v925 = vmul.f32 %v924, -0.00019511016
    %v926 = vadd.f32 %v925, 0.008332121
    %v927 = vmul.f32 %v924, %v926
    %v928 = vadd.f32 %v927, -0.16666654
    %v929 = vmul.f32 %v924, %v928
    %v930 = vadd.f32 %v929, 1.0
    %v931 = vmul.f32 %v930, %v915
    %vm932 = vweird.f32 %v171
    %v933 = vand.u32 %v916, 3
    %vm934 = vcmp.lt.s32.totalorder %v933, 2
    %vm935 = vcmp.eq.s32.totalorder %v933, 0
    %v936 = vxor.u32 %v931, 2147483648
    %v937 = vsel %vm935, %v923, %v936
    %vm938 = vcmp.eq.s32.totalorder %v933, 2
    %v939 = vxor.u32 %v923, 2147483648
    %v940 = vsel %vm938, %v939, %v931
    %v941 = vsel %vm934, %v937, %v940
    %v942 = vsel %vm932, nan, %v941
    %v943 = vand.u32 2147483647, %v91
    %vm944 = vcmp.le.f32.partialorder %v943, 0.7853982
    %vm945 = vcmp.lt.s32.totalorder %v91, 0
    %v946 = vand.u32 %v91, 2139095040
    %v947 = vshrl.u32 %v946, 23
    %v948 = vsub.s32 %v947, 127
    %v949 = vand.u32 2147483647, %v91
    %v950 = vand.u32 %v949, 8388607
    %v951 = vor.u32 %v950, 8388608
    %v952 = vsub.s32 0, %v951
    %v953 = vadd.s32 %v948, 1
    %vm954 = vcmp.gt.s32.totalorder %v953, 0
    %v955 = vsel %vm954, %v953, 0
    %v956 = vshrl.u32 %v955, 5
    %v957 = vand.u32 %v955, 31
    %v958 = vsub.s32 32, %v957
    %v959 = vshrl.u32 683565275, %v958
    %v960 = vshll.u32 683565275, %v957
    %v961 = vshrl.u32 2475754826, %v958
    %v962 = vor.u32 %v960, %v961
    %v963 = vshll.u32 2475754826, %v957
    %v964 = vshrl.u32 2131351028, %v958
    %v965 = vor.u32 %v963, %v964
    %v966 = vshll.u32 2131351028, %v957
    %v967 = vshrl.u32 2102212464, %v958
    %v968 = vor.u32 %v966, %v967
    %v969 = vshll.u32 2102212464, %v957
    %v970 = vshrl.u32 920167782, %v958
    %v971 = vor.u32 %v969, %v970
    %v972 = vshll.u32 920167782, %v957
    %v973 = vshrl.u32 1326507024, %v958
    %v974 = vor.u32 %v972, %v973
    %vm975 = vcmp.lt.s32.totalorder %v956, 1
    %vm976 = vcmp.lt.s32.totalorder %v956, 2
    %vm977 = vcmp.lt.s32.totalorder %v956, 3
    %vm978 = vcmp.lt.s32.totalorder %v956, 4
    %v979 = vsel %vm975, %v959, %v962
    %v980 = vsel %vm978, %v968, 2102212464
    %v981 = vsel %vm977, %v965, %v980
    %v982 = vsel %vm976, %v979, %v981
    %v983 = vsel %vm975, %v962, %v965
    %v984 = vsel %vm978, %v971, 920167782
    %v985 = vsel %vm977, %v968, %v984
    %v986 = vsel %vm976, %v983, %v985
    %v987 = vsel %vm975, %v965, %v968
    %v988 = vsel %vm978, %v974, 1326507024
    %v989 = vsel %vm977, %v971, %v988
    %v990 = vsel %vm976, %v987, %v989
    %v991 = vshll.u32 %v951, 8
    %v992 = vand.u32 %v991, 65535
    %v993 = vshrl.u32 %v991, 16
    %v994 = vand.u32 %v990, 65535
    %v995 = vshrl.u32 %v990, 16
    %v996 = vmul.u32 %v992, %v994
    %v997 = vmul.u32 %v992, %v995
    %v998 = vmul.u32 %v993, %v994
    %v999 = vmul.u32 %v993, %v995
    %v1000 = vshll.u32 %v997, 16
    %v1001 = vshrl.u32 %v997, 16
    %v1002 = vshll.u32 %v998, 16
    %v1003 = vshrl.u32 %v998, 16
    %vm1004 = vc.u32 %v996, %v1000
    %v1005 = vsel %vm1004, 1, 0
    %v1006 = vadd.s32 %v996, %v1000
    %v1007 = vadd.s32 %v999, %v1005
    %vm1008 = vc.u32 %v1006, %v1002
    %v1009 = vsel %vm1008, 1, 0
    %v1010 = vadd.s32 %v1006, %v1002
    %v1011 = vadd.s32 %v1007, %v1009
    %v1012 = vadd.s32 %v1011, %v1001
    %v1013 = vadd.s32 %v1012, %v1003
    %v1014 = vand.u32 %v991, 65535
    %v1015 = vshrl.u32 %v991, 16
    %v1016 = vand.u32 %v986, 65535
    %v1017 = vshrl.u32 %v986, 16
    %v1018 = vmul.u32 %v1014, %v1016
    %v1019 = vmul.u32 %v1014, %v1017
    %v1020 = vmul.u32 %v1015, %v1016
    %v1021 = vmul.u32 %v1015, %v1017
    %v1022 = vshll.u32 %v1019, 16
    %v1023 = vshrl.u32 %v1019, 16
    %v1024 = vshll.u32 %v1020, 16
    %v1025 = vshrl.u32 %v1020, 16
    %vm1026 = vc.u32 %v1018, %v1022
    %v1027 = vsel %vm1026, 1, 0
    %v1028 = vadd.s32 %v1018, %v1022
    %v1029 = vadd.s32 %v1021, %v1027
    %vm1030 = vc.u32 %v1028, %v1024
    %v1031 = vsel %vm1030, 1, 0
    %v1032 = vadd.s32 %v1028, %v1024
    %v1033 = vadd.s32 %v1029, %v1031
    %v1034 = vadd.s32 %v1033, %v1023
    %v1035 = vadd.s32 %v1034, %v1025
    %v1036 = vmul.u32 %v991, %v982
    %v1037 = vadd.s32 %v1013, %v1032
    %vm1038 = vc.u32 %v1013, %v1032
    %v1039 = vadd.s32 %v1035, 1
    %v1040 = vsel %vm1038, %v1039, %v1035
    %v1041 = vadd.s32 %v1036, %v1040
    %v1042 = vadd.s32 %v1041, 536870912
    %v1043 = vshrl.u32 %v1042, 30
    %v1044 = vshll.u32 %v1043, 30
    %v1045 = vsub.s32 %v1041, %v1044
    %vm1046 = vcmp.lt.s32.totalorder %v1045, 0
    %v1047 = vsub.s32 0, %v1045
    %v1048 = vsel %vm1046, %v1047, %v1045
    %v1049 = vclz %v1048
    %v1050 = vsub.s32 %v1049, 2
    %vm1051 = vcmp.gt.s32.totalorder 0, %v1050
    %v1052 = vsel %vm1051, 0, %v1050
    %v1053 = vsub.s32 32, %v1052
    %v1054 = vshll.u32 %v1045, %v1052
    %v1055 = vshrl.u32 %v1037, %v1053
    %v1056 = vor.u32 %v1054, %v1055
    %v1057 = vsub.s32 4294967266, %v1052
    %v1058 = vadd.s32 %v1057, 127
    %v1059 = vshll.u32 %v1058, 23
    %v1060 = vor.u32 4788187, %v1059
    %v1061 = vand.u32 2147483647, %v1060
    %v1063 = vcvt.s32.f32 %v1056
    %v1064 = vmul.f32 %v1063, %v1061
    %v1065 = vxor.u32 %v1064, 2147483648
    %v1066 = vsel %vm945, %v1065, %v1064
    %v1067 = vsub.s32 4, %v1043
    %v1068 = vsel %vm945, %v1067, %v1043
    %v1069 = vsel %vm944, %v91, %v1066
    %v1070 = vsel %vm944, 0, %v1068
    %v1071 = vmul.f32 %v1069, %v1069
    %v1072 = vmul.f32 %v1071, -0.001358992
    %v1073 = vadd.f32 %v1072, 0.041655596
    %v1074 = vmul.f32 %v1071, %v1073
    %v1075 = vadd.f32 %v1074, -0.4999988
    %v1076 = vmul.f32 %v1071, %v1075
    %v1077 = vadd.f32 1.0, %v1076
    %v1078 = vmul.f32 %v1069, %v1069
    %v1079 = vmul.f32 %v1078, -0.00019511016
    %v1080 = vadd.f32 %v1079, 0.008332121
    %v1081 = vmul.f32 %v1078, %v1080
    %v1082 = vadd.f32 %v1081, -0.16666654
    %v1083 = vmul.f32 %v1078, %v1082
    %v1084 = vadd.f32 %v1083, 1.0
    %v1085 = vmul.f32 %v1084, %v1069
    %vm1086 = vweird.f32 %v91
    %v1087 = vadd.s32 %v1070, 3
    %v1088 = vand.u32 %v1087, 3
    %vm1089 = vcmp.lt.s32.totalorder %v1088, 2
    %vm1090 = vcmp.eq.s32.totalorder %v1088, 0
    %v1091 = vxor.u32 %v1085, 2147483648
    %v1092 = vsel %vm1090, %v1077, %v1091
    %vm1093 = vcmp.eq.s32.totalorder %v1088, 2
    %v1094 = vxor.u32 %v1077, 2147483648
    %v1095 = vsel %vm1093, %v1094, %v1085
    %v1096 = vsel %vm1089, %v1092, %v1095
    %v1097 = vsel %vm1086, nan, %v1096
    %v1098 = vand.u32 2147483647, %v111
    %vm1099 = vcmp.le.f32.partialorder %v1098, 0.7853982
    %vm1100 = vcmp.lt.s32.totalorder %v111, 0
    %v1101 = vand.u32 %v111, 2139095040
    %v1102 = vshrl.u32 %v1101, 23
    %v1103 = vsub.s32 %v1102, 127
    %v1104 = vand.u32 2147483647, %v111
    %v1105 = vand.u32 %v1104, 8388607
    %v1106 = vor.u32 %v1105, 8388608
    %v1107 = vsub.s32 0, %v1106
    %v1108 = vadd.s32 %v1103, 1
    %vm1109 = vcmp.gt.s32.totalorder %v1108, 0
    %v1110 = vsel %vm1109, %v1108, 0
    %v1111 = vshrl.u32 %v1110, 5
    %v1112 = vand.u32 %v1110, 31
    %v1113 = vsub.s32 32, %v1112
    %v1114 = vshrl.u32 683565275, %v1113
    %v1115 = vshll.u32 683565275, %v1112
    %v1116 = vshrl.u32 2475754826, %v1113
    %v1117 = vor.u32 %v1115, %v1116
    %v1118 = vshll.u32 2475754826, %v1112
    %v1119 = vshrl.u32 2131351028, %v1113
    %v1120 = vor.u32 %v1118, %v1119
    %v1121 = vshll.u32 2131351028, %v1112
    %v1122 = vshrl.u32 2102212464, %v1113
    %v1123 = vor.u32 %v1121, %v1122
    %v1124 = vshll.u32 2102212464, %v1112
    %v1125 = vshrl.u32 920167782, %v1113
    %v1126 = vor.u32 %v1124, %v1125
    %v1127 = vshll.u32 920167782, %v1112
    %v1128 = vshrl.u32 1326507024, %v1113
    %v1129 = vor.u32 %v1127, %v1128
    %vm1130 = vcmp.lt.s32.totalorder %v1111, 1
    %vm1131 = vcmp.lt.s32.totalorder %v1111, 2
    %vm1132 = vcmp.lt.s32.totalorder %v1111, 3
    %vm1133 = vcmp.lt.s32.totalorder %v1111, 4
    %v1134 = vsel %vm1130, %v1114, %v1117
    %v1135 = vsel %vm1133, %v1123, 2102212464
    %v1136 = vsel %vm1132, %v1120, %v1135
    %v1137 = vsel %vm1131, %v1134, %v1136
    %v1138 = vsel %vm1130, %v1117, %v1120
    %v1139 = vsel %vm1133, %v1126, 920167782
    %v1140 = vsel %vm1132, %v1123, %v1139
    %v1141 = vsel %vm1131, %v1138, %v1140
    %v1142 = vsel %vm1130, %v1120, %v1123
    %v1143 = vsel %vm1133, %v1129, 1326507024
    %v1144 = vsel %vm1132, %v1126, %v1143
    %v1145 = vsel %vm1131, %v1142, %v1144
    %v1146 = vshll.u32 %v1106, 8
    %v1147 = vand.u32 %v1146, 65535
    %v1148 = vshrl.u32 %v1146, 16
    %v1149 = vand.u32 %v1145, 65535
    %v1150 = vshrl.u32 %v1145, 16
    %v1151 = vmul.u32 %v1147, %v1149
    %v1152 = vmul.u32 %v1147, %v1150
    %v1153 = vmul.u32 %v1148, %v1149
    %v1154 = vmul.u32 %v1148, %v1150
    %v1155 = vshll.u32 %v1152, 16
    %v1156 = vshrl.u32 %v1152, 16
    %v1157 = vshll.u32 %v1153, 16
    %v1158 = vshrl.u32 %v1153, 16
    %vm1159 = vc.u32 %v1151, %v1155
    %v1160 = vsel %vm1159, 1, 0
    %v1161 = vadd.s32 %v1151, %v1155
    %v1162 = vadd.s32 %v1154, %v1160
    %vm1163 = vc.u32 %v1161, %v1157
    %v1164 = vsel %vm1163, 1, 0
    %v1165 = vadd.s32 %v1161, %v1157
    %v1166 = vadd.s32 %v1162, %v1164
    %v1167 = vadd.s32 %v1166, %v1156
    %v1168 = vadd.s32 %v1167, %v1158
    %v1169 = vand.u32 %v1146, 65535
    %v1170 = vshrl.u32 %v1146, 16
    %v1171 = vand.u32 %v1141, 65535
    %v1172 = vshrl.u32 %v1141, 16
    %v1173 = vmul.u32 %v1169, %v1171
    %v1174 = vmul.u32 %v1169, %v1172
    %v1175 = vmul.u32 %v1170, %v1171
    %v1176 = vmul.u32 %v1170, %v1172
    %v1177 = vshll.u32 %v1174, 16
    %v1178 = vshrl.u32 %v1174, 16
    %v1179 = vshll.u32 %v1175, 16
    %v1180 = vshrl.u32 %v1175, 16
    %vm1181 = vc.u32 %v1173, %v1177
    %v1182 = vsel %vm1181, 1, 0
    %v1183 = vadd.s32 %v1173, %v1177
    %v1184 = vadd.s32 %v1176, %v1182
    %vm1185 = vc.u32 %v1183, %v1179
    %v1186 = vsel %vm1185, 1, 0
    %v1187 = vadd.s32 %v1183, %v1179
    %v1188 = vadd.s32 %v1184, %v1186
    %v1189 = vadd.s32 %v1188, %v1178
    %v1190 = vadd.s32 %v1189, %v1180
    %v1191 = vmul.u32 %v1146, %v1137
    %v1192 = vadd.s32 %v1168, %v1187
    %vm1193 = vc.u32 %v1168, %v1187
    %v1194 = vadd.s32 %v1190, 1
    %v1195 = vsel %vm1193, %v1194, %v1190
    %v1196 = vadd.s32 %v1191, %v1195
    %v1197 = vadd.s32 %v1196, 536870912
    %v1198 = vshrl.u32 %v1197, 30
    %v1199 = vshll.u32 %v1198, 30
    %v1200 = vsub.s32 %v1196, %v1199
    %vm1201 = vcmp.lt.s32.totalorder %v1200, 0
    %v1202 = vsub.s32 0, %v1200
    %v1203 = vsel %vm1201, %v1202, %v1200
    %v1204 = vclz %v1203
    %v1205 = vsub.s32 %v1204, 2
    %vm1206 = vcmp.gt.s32.totalorder 0, %v1205
    %v1207 = vsel %vm1206, 0, %v1205
    %v1208 = vsub.s32 32, %v1207
    %v1209 = vshll.u32 %v1200, %v1207
    %v1210 = vshrl.u32 %v1192, %v1208
    %v1211 = vor.u32 %v1209, %v1210
    %v1212 = vsub.s32 4294967266, %v1207
    %v1213 = vadd.s32 %v1212, 127
    %v1214 = vshll.u32 %v1213, 23
    %v1215 = vor.u32 4788187, %v1214
    %v1216 = vand.u32 2147483647, %v1215
    %v1218 = vcvt.s32.f32 %v1211
    %v1219 = vmul.f32 %v1218, %v1216
    %v1220 = vxor.u32 %v1219, 2147483648
    %v1221 = vsel %vm1100, %v1220, %v1219
    %v1222 = vsub.s32 4, %v1198
    %v1223 = vsel %vm1100, %v1222, %v1198
    %v1224 = vsel %vm1099, %v111, %v1221
    %v1225 = vsel %vm1099, 0, %v1223
    %v1226 = vmul.f32 %v1224, %v1224
    %v1227 = vmul.f32 %v1226, -0.001358992
    %v1228 = vadd.f32 %v1227, 0.041655596
    %v1229 = vmul.f32 %v1226, %v1228
    %v1230 = vadd.f32 %v1229, -0.4999988
    %v1231 = vmul.f32 %v1226, %v1230
    %v1232 = vadd.f32 1.0, %v1231
    %v1233 = vmul.f32 %v1224, %v1224
    %v1234 = vmul.f32 %v1233, -0.00019511016
    %v1235 = vadd.f32 %v1234, 0.008332121
    %v1236 = vmul.f32 %v1233, %v1235
    %v1237 = vadd.f32 %v1236, -0.16666654
    %v1238 = vmul.f32 %v1233, %v1237
    %v1239 = vadd.f32 %v1238, 1.0
    %v1240 = vmul.f32 %v1239, %v1224
    %vm1241 = vweird.f32 %v111
    %v1242 = vadd.s32 %v1225, 3
    %v1243 = vand.u32 %v1242, 3
    %vm1244 = vcmp.lt.s32.totalorder %v1243, 2
    %vm1245 = vcmp.eq.s32.totalorder %v1243, 0
    %v1246 = vxor.u32 %v1240, 2147483648
    %v1247 = vsel %vm1245, %v1232, %v1246
    %vm1248 = vcmp.eq.s32.totalorder %v1243, 2
    %v1249 = vxor.u32 %v1232, 2147483648
    %v1250 = vsel %vm1248, %v1249, %v1240
    %v1251 = vsel %vm1244, %v1247, %v1250
    %v1252 = vsel %vm1241, nan, %v1251
    %v1253 = vand.u32 2147483647, %v131
    %vm1254 = vcmp.le.f32.partialorder %v1253, 0.7853982
    %vm1255 = vcmp.lt.s32.totalorder %v131, 0
    %v1256 = vand.u32 %v131, 2139095040
    %v1257 = vshrl.u32 %v1256, 23
    %v1258 = vsub.s32 %v1257, 127
    %v1259 = vand.u32 2147483647, %v131
    %v1260 = vand.u32 %v1259, 8388607
    %v1261 = vor.u32 %v1260, 8388608
    %v1262 = vsub.s32 0, %v1261
    %v1263 = vadd.s32 %v1258, 1
    %vm1264 = vcmp.gt.s32.totalorder %v1263, 0
    %v1265 = vsel %vm1264, %v1263, 0
    %v1266 = vshrl.u32 %v1265, 5
    %v1267 = vand.u32 %v1265, 31
    %v1268 = vsub.s32 32, %v1267
    %v1269 = vshrl.u32 683565275, %v1268
    %v1270 = vshll.u32 683565275, %v1267
    %v1271 = vshrl.u32 2475754826, %v1268
    %v1272 = vor.u32 %v1270, %v1271
    %v1273 = vshll.u32 2475754826, %v1267
    %v1274 = vshrl.u32 2131351028, %v1268
    %v1275 = vor.u32 %v1273, %v1274
    %v1276 = vshll.u32 2131351028, %v1267
    %v1277 = vshrl.u32 2102212464, %v1268
    %v1278 = vor.u32 %v1276, %v1277
    %v1279 = vshll.u32 2102212464, %v1267
    %v1280 = vshrl.u32 920167782, %v1268
    %v1281 = vor.u32 %v1279, %v1280
    %v1282 = vshll.u32 920167782, %v1267
    %v1283 = vshrl.u32 1326507024, %v1268
    %v1284 = vor.u32 %v1282, %v1283
    %vm1285 = vcmp.lt.s32.totalorder %v1266, 1
    %vm1286 = vcmp.lt.s32.totalorder %v1266, 2
    %vm1287 = vcmp.lt.s32.totalorder %v1266, 3
    %vm1288 = vcmp.lt.s32.totalorder %v1266, 4
    %v1289 = vsel %vm1285, %v1269, %v1272
    %v1290 = vsel %vm1288, %v1278, 2102212464
    %v1291 = vsel %vm1287, %v1275, %v1290
    %v1292 = vsel %vm1286, %v1289, %v1291
    %v1293 = vsel %vm1285, %v1272, %v1275
    %v1294 = vsel %vm1288, %v1281, 920167782
    %v1295 = vsel %vm1287, %v1278, %v1294
    %v1296 = vsel %vm1286, %v1293, %v1295
    %v1297 = vsel %vm1285, %v1275, %v1278
    %v1298 = vsel %vm1288, %v1284, 1326507024
    %v1299 = vsel %vm1287, %v1281, %v1298
    %v1300 = vsel %vm1286, %v1297, %v1299
    %v1301 = vshll.u32 %v1261, 8
    %v1302 = vand.u32 %v1301, 65535
    %v1303 = vshrl.u32 %v1301, 16
    %v1304 = vand.u32 %v1300, 65535
    %v1305 = vshrl.u32 %v1300, 16
    %v1306 = vmul.u32 %v1302, %v1304
    %v1307 = vmul.u32 %v1302, %v1305
    %v1308 = vmul.u32 %v1303, %v1304
    %v1309 = vmul.u32 %v1303, %v1305
    %v1310 = vshll.u32 %v1307, 16
    %v1311 = vshrl.u32 %v1307, 16
    %v1312 = vshll.u32 %v1308, 16
    %v1313 = vshrl.u32 %v1308, 16
    %vm1314 = vc.u32 %v1306, %v1310
    %v1315 = vsel %vm1314, 1, 0
    %v1316 = vadd.s32 %v1306, %v1310
    %v1317 = vadd.s32 %v1309, %v1315
    %vm1318 = vc.u32 %v1316, %v1312
    %v1319 = vsel %vm1318, 1, 0
    %v1320 = vadd.s32 %v1316, %v1312
    %v1321 = vadd.s32 %v1317, %v1319
    %v1322 = vadd.s32 %v1321, %v1311
    %v1323 = vadd.s32 %v1322, %v1313
    %v1324 = vand.u32 %v1301, 65535
    %v1325 = vshrl.u32 %v1301, 16
    %v1326 = vand.u32 %v1296, 65535
    %v1327 = vshrl.u32 %v1296, 16
    %v1328 = vmul.u32 %v1324, %v1326
    %v1329 = vmul.u32 %v1324, %v1327
    %v1330 = vmul.u32 %v1325, %v1326
    %v1331 = vmul.u32 %v1325, %v1327
    %v1332 = vshll.u32 %v1329, 16
    %v1333 = vshrl.u32 %v1329, 16
    %v1334 = vshll.u32 %v1330, 16
    %v1335 = vshrl.u32 %v1330, 16
    %vm1336 = vc.u32 %v1328, %v1332
    %v1337 = vsel %vm1336, 1, 0
    %v1338 = vadd.s32 %v1328, %v1332
    %v1339 = vadd.s32 %v1331, %v1337
    %vm1340 = vc.u32 %v1338, %v1334
    %v1341 = vsel %vm1340, 1, 0
    %v1342 = vadd.s32 %v1338, %v1334
    %v1343 = vadd.s32 %v1339, %v1341
    %v1344 = vadd.s32 %v1343, %v1333
    %v1345 = vadd.s32 %v1344, %v1335
    %v1346 = vmul.u32 %v1301, %v1292
    %v1347 = vadd.s32 %v1323, %v1342
    %vm1348 = vc.u32 %v1323, %v1342
    %v1349 = vadd.s32 %v1345, 1
    %v1350 = vsel %vm1348, %v1349, %v1345
    %v1351 = vadd.s32 %v1346, %v1350
    %v1352 = vadd.s32 %v1351, 536870912
    %v1353 = vshrl.u32 %v1352, 30
    %v1354 = vshll.u32 %v1353, 30
    %v1355 = vsub.s32 %v1351, %v1354
    %vm1356 = vcmp.lt.s32.totalorder %v1355, 0
    %v1357 = vsub.s32 0, %v1355
    %v1358 = vsel %vm1356, %v1357, %v1355
    %v1359 = vclz %v1358
    %v1360 = vsub.s32 %v1359, 2
    %vm1361 = vcmp.gt.s32.totalorder 0, %v1360
    %v1362 = vsel %vm1361, 0, %v1360
    %v1363 = vsub.s32 32, %v1362
    %v1364 = vshll.u32 %v1355, %v1362
    %v1365 = vshrl.u32 %v1347, %v1363
    %v1366 = vor.u32 %v1364, %v1365
    %v1367 = vsub.s32 4294967266, %v1362
    %v1368 = vadd.s32 %v1367, 127
    %v1369 = vshll.u32 %v1368, 23
    %v1370 = vor.u32 4788187, %v1369
    %v1371 = vand.u32 2147483647, %v1370
    %v1373 = vcvt.s32.f32 %v1366
    %v1374 = vmul.f32 %v1373, %v1371
    %v1375 = vxor.u32 %v1374, 2147483648
    %v1376 = vsel %vm1255, %v1375, %v1374
    %v1377 = vsub.s32 4, %v1353
    %v1378 = vsel %vm1255, %v1377, %v1353
    %v1379 = vsel %vm1254, %v131, %v1376
    %v1380 = vsel %vm1254, 0, %v1378
    %v1381 = vmul.f32 %v1379, %v1379
    %v1382 = vmul.f32 %v1381, -0.001358992
    %v1383 = vadd.f32 %v1382, 0.041655596
    %v1384 = vmul.f32 %v1381, %v1383
    %v1385 = vadd.f32 %v1384, -0.4999988
    %v1386 = vmul.f32 %v1381, %v1385
    %v1387 = vadd.f32 1.0, %v1386
    %v1388 = vmul.f32 %v1379, %v1379
    %v1389 = vmul.f32 %v1388, -0.00019511016
    %v1390 = vadd.f32 %v1389, 0.008332121
    %v1391 = vmul.f32 %v1388, %v1390
    %v1392 = vadd.f32 %v1391, -0.16666654
    %v1393 = vmul.f32 %v1388, %v1392
    %v1394 = vadd.f32 %v1393, 1.0
    %v1395 = vmul.f32 %v1394, %v1379
    %vm1396 = vweird.f32 %v131
    %v1397 = vadd.s32 %v1380, 3
    %v1398 = vand.u32 %v1397, 3
    %vm1399 = vcmp.lt.s32.totalorder %v1398, 2
    %vm1400 = vcmp.eq.s32.totalorder %v1398, 0
    %v1401 = vxor.u32 %v1395, 2147483648
    %v1402 = vsel %vm1400, %v1387, %v1401
    %vm1403 = vcmp.eq.s32.totalorder %v1398, 2
    %v1404 = vxor.u32 %v1387, 2147483648
    %v1405 = vsel %vm1403, %v1404, %v1395
    %v1406 = vsel %vm1399, %v1402, %v1405
    %v1407 = vsel %vm1396, nan, %v1406
    %v1408 = vand.u32 2147483647, %v151
    %vm1409 = vcmp.le.f32.partialorder %v1408, 0.7853982
    %vm1410 = vcmp.lt.s32.totalorder %v151, 0
    %v1411 = vand.u32 %v151, 2139095040
    %v1412 = vshrl.u32 %v1411, 23
    %v1413 = vsub.s32 %v1412, 127
    %v1414 = vand.u32 2147483647, %v151
    %v1415 = vand.u32 %v1414, 8388607
    %v1416 = vor.u32 %v1415, 8388608
    %v1417 = vsub.s32 0, %v1416
    %v1418 = vadd.s32 %v1413, 1
    %vm1419 = vcmp.gt.s32.totalorder %v1418, 0
    %v1420 = vsel %vm1419, %v1418, 0
    %v1421 = vshrl.u32 %v1420, 5
    %v1422 = vand.u32 %v1420, 31
    %v1423 = vsub.s32 32, %v1422
    %v1424 = vshrl.u32 683565275, %v1423
    %v1425 = vshll.u32 683565275, %v1422
    %v1426 = vshrl.u32 2475754826, %v1423
    %v1427 = vor.u32 %v1425, %v1426
    %v1428 = vshll.u32 2475754826, %v1422
    %v1429 = vshrl.u32 2131351028, %v1423
    %v1430 = vor.u32 %v1428, %v1429
    %v1431 = vshll.u32 2131351028, %v1422
    %v1432 = vshrl.u32 2102212464, %v1423
    %v1433 = vor.u32 %v1431, %v1432
    %v1434 = vshll.u32 2102212464, %v1422
    %v1435 = vshrl.u32 920167782, %v1423
    %v1436 = vor.u32 %v1434, %v1435
    %v1437 = vshll.u32 920167782, %v1422
    %v1438 = vshrl.u32 1326507024, %v1423
    %v1439 = vor.u32 %v1437, %v1438
    %vm1440 = vcmp.lt.s32.totalorder %v1421, 1
    %vm1441 = vcmp.lt.s32.totalorder %v1421, 2
    %vm1442 = vcmp.lt.s32.totalorder %v1421, 3
    %vm1443 = vcmp.lt.s32.totalorder %v1421, 4
    %v1444 = vsel %vm1440, %v1424, %v1427
    %v1445 = vsel %vm1443, %v1433, 2102212464
    %v1446 = vsel %vm1442, %v1430, %v1445
    %v1447 = vsel %vm1441, %v1444, %v1446
    %v1448 = vsel %vm1440, %v1427, %v1430
    %v1449 = vsel %vm1443, %v1436, 920167782
    %v1450 = vsel %vm1442, %v1433, %v1449
    %v1451 = vsel %vm1441, %v1448, %v1450
    %v1452 = vsel %vm1440, %v1430, %v1433
    %v1453 = vsel %vm1443, %v1439, 1326507024
    %v1454 = vsel %vm1442, %v1436, %v1453
    %v1455 = vsel %vm1441, %v1452, %v1454
    %v1456 = vshll.u32 %v1416, 8
    %v1457 = vand.u32 %v1456, 65535
    %v1458 = vshrl.u32 %v1456, 16
    %v1459 = vand.u32 %v1455, 65535
    %v1460 = vshrl.u32 %v1455, 16
    %v1461 = vmul.u32 %v1457, %v1459
    %v1462 = vmul.u32 %v1457, %v1460
    %v1463 = vmul.u32 %v1458, %v1459
    %v1464 = vmul.u32 %v1458, %v1460
    %v1465 = vshll.u32 %v1462, 16
    %v1466 = vshrl.u32 %v1462, 16
    %v1467 = vshll.u32 %v1463, 16
    %v1468 = vshrl.u32 %v1463, 16
    %vm1469 = vc.u32 %v1461, %v1465
    %v1470 = vsel %vm1469, 1, 0
    %v1471 = vadd.s32 %v1461, %v1465
    %v1472 = vadd.s32 %v1464, %v1470
    %vm1473 = vc.u32 %v1471, %v1467
    %v1474 = vsel %vm1473, 1, 0
    %v1475 = vadd.s32 %v1471, %v1467
    %v1476 = vadd.s32 %v1472, %v1474
    %v1477 = vadd.s32 %v1476, %v1466
    %v1478 = vadd.s32 %v1477, %v1468
    %v1479 = vand.u32 %v1456, 65535
    %v1480 = vshrl.u32 %v1456, 16
    %v1481 = vand.u32 %v1451, 65535
    %v1482 = vshrl.u32 %v1451, 16
    %v1483 = vmul.u32 %v1479, %v1481
    %v1484 = vmul.u32 %v1479, %v1482
    %v1485 = vmul.u32 %v1480, %v1481
    %v1486 = vmul.u32 %v1480, %v1482
    %v1487 = vshll.u32 %v1484, 16
    %v1488 = vshrl.u32 %v1484, 16
    %v1489 = vshll.u32 %v1485, 16
    %v1490 = vshrl.u32 %v1485, 16
    %vm1491 = vc.u32 %v1483, %v1487
    %v1492 = vsel %vm1491, 1, 0
    %v1493 = vadd.s32 %v1483, %v1487
    %v1494 = vadd.s32 %v1486, %v1492
    %vm1495 = vc.u32 %v1493, %v1489
    %v1496 = vsel %vm1495, 1, 0
    %v1497 = vadd.s32 %v1493, %v1489
    %v1498 = vadd.s32 %v1494, %v1496
    %v1499 = vadd.s32 %v1498, %v1488
    %v1500 = vadd.s32 %v1499, %v1490
    %v1501 = vmul.u32 %v1456, %v1447
    %v1502 = vadd.s32 %v1478, %v1497
    %vm1503 = vc.u32 %v1478, %v1497
    %v1504 = vadd.s32 %v1500, 1
    %v1505 = vsel %vm1503, %v1504, %v1500
    %v1506 = vadd.s32 %v1501, %v1505
    %v1507 = vadd.s32 %v1506, 536870912
    %v1508 = vshrl.u32 %v1507, 30
    %v1509 = vshll.u32 %v1508, 30
    %v1510 = vsub.s32 %v1506, %v1509
    %vm1511 = vcmp.lt.s32.totalorder %v1510, 0
    %v1512 = vsub.s32 0, %v1510
    %v1513 = vsel %vm1511, %v1512, %v1510
    %v1514 = vclz %v1513
    %v1515 = vsub.s32 %v1514, 2
    %vm1516 = vcmp.gt.s32.totalorder 0, %v1515
    %v1517 = vsel %vm1516, 0, %v1515
    %v1518 = vsub.s32 32, %v1517
    %v1519 = vshll.u32 %v1510, %v1517
    %v1520 = vshrl.u32 %v1502, %v1518
    %v1521 = vor.u32 %v1519, %v1520
    %v1522 = vsub.s32 4294967266, %v1517
    %v1523 = vadd.s32 %v1522, 127
    %v1524 = vshll.u32 %v1523, 23
    %v1525 = vor.u32 4788187, %v1524
    %v1526 = vand.u32 2147483647, %v1525
    %v1528 = vcvt.s32.f32 %v1521
    %v1529 = vmul.f32 %v1528, %v1526
    %v1530 = vxor.u32 %v1529, 2147483648
    %v1531 = vsel %vm1410, %v1530, %v1529
    %v1532 = vsub.s32 4, %v1508
    %v1533 = vsel %vm1410, %v1532, %v1508
    %v1534 = vsel %vm1409, %v151, %v1531
    %v1535 = vsel %vm1409, 0, %v1533
    %v1536 = vmul.f32 %v1534, %v1534
    %v1537 = vmul.f32 %v1536, -0.001358992
    %v1538 = vadd.f32 %v1537, 0.041655596
    %v1539 = vmul.f32 %v1536, %v1538
    %v1540 = vadd.f32 %v1539, -0.4999988
    %v1541 = vmul.f32 %v1536, %v1540
    %v1542 = vadd.f32 1.0, %v1541
    %v1543 = vmul.f32 %v1534, %v1534
    %v1544 = vmul.f32 %v1543, -0.00019511016
    %v1545 = vadd.f32 %v1544, 0.008332121
    %v1546 = vmul.f32 %v1543, %v1545
    %v1547 = vadd.f32 %v1546, -0.16666654
    %v1548 = vmul.f32 %v1543, %v1547
    %v1549 = vadd.f32 %v1548, 1.0
    %v1550 = vmul.f32 %v1549, %v1534
    %vm1551 = vweird.f32 %v151
    %v1552 = vadd.s32 %v1535, 3
    %v1553 = vand.u32 %v1552, 3
    %vm1554 = vcmp.lt.s32.totalorder %v1553, 2
    %vm1555 = vcmp.eq.s32.totalorder %v1553, 0
    %v1556 = vxor.u32 %v1550, 2147483648
    %v1557 = vsel %vm1555, %v1542, %v1556
    %vm1558 = vcmp.eq.s32.totalorder %v1553, 2
    %v1559 = vxor.u32 %v1542, 2147483648
    %v1560 = vsel %vm1558, %v1559, %v1550
    %v1561 = vsel %vm1554, %v1557, %v1560
    %v1562 = vsel %vm1551, nan, %v1561
    %v1563 = vand.u32 2147483647, %v171
    %vm1564 = vcmp.le.f32.partialorder %v1563, 0.7853982
    %vm1565 = vcmp.lt.s32.totalorder %v171, 0
    %v1566 = vand.u32 %v171, 2139095040
    %v1567 = vshrl.u32 %v1566, 23
    %v1568 = vsub.s32 %v1567, 127
    %v1569 = vand.u32 2147483647, %v171
    %v1570 = vand.u32 %v1569, 8388607
    %v1571 = vor.u32 %v1570, 8388608
    %v1572 = vsub.s32 0, %v1571
    %v1573 = vadd.s32 %v1568, 1
    %vm1574 = vcmp.gt.s32.totalorder %v1573, 0
    %v1575 = vsel %vm1574, %v1573, 0
    %v1576 = vshrl.u32 %v1575, 5
    %v1577 = vand.u32 %v1575, 31
    %v1578 = vsub.s32 32, %v1577
    %v1579 = vshrl.u32 683565275, %v1578
    %v1580 = vshll.u32 683565275, %v1577
    %v1581 = vshrl.u32 2475754826, %v1578
    %v1582 = vor.u32 %v1580, %v1581
    %v1583 = vshll.u32 2475754826, %v1577
    %v1584 = vshrl.u32 2131351028, %v1578
    %v1585 = vor.u32 %v1583, %v1584
    %v1586 = vshll.u32 2131351028, %v1577
    %v1587 = vshrl.u32 2102212464, %v1578
    %v1588 = vor.u32 %v1586, %v1587
    %v1589 = vshll.u32 2102212464, %v1577
    %v1590 = vshrl.u32 920167782, %v1578
    %v1591 = vor.u32 %v1589, %v1590
    %v1592 = vshll.u32 920167782, %v1577
    %v1593 = vshrl.u32 1326507024, %v1578
    %v1594 = vor.u32 %v1592, %v1593
    %vm1595 = vcmp.lt.s32.totalorder %v1576, 1
    %vm1596 = vcmp.lt.s32.totalorder %v1576, 2
    %vm1597 = vcmp.lt.s32.totalorder %v1576, 3
    %vm1598 = vcmp.lt.s32.totalorder %v1576, 4
    %v1599 = vsel %vm1595, %v1579, %v1582
    %v1600 = vsel %vm1598, %v1588, 2102212464
    %v1601 = vsel %vm1597, %v1585, %v1600
    %v1602 = vsel %vm1596, %v1599, %v1601
    %v1603 = vsel %vm1595, %v1582, %v1585
    %v1604 = vsel %vm1598, %v1591, 920167782
    %v1605 = vsel %vm1597, %v1588, %v1604
    %v1606 = vsel %vm1596, %v1603, %v1605
    %v1607 = vsel %vm1595, %v1585, %v1588
    %v1608 = vsel %vm1598, %v1594, 1326507024
    %v1609 = vsel %vm1597, %v1591, %v1608
    %v1610 = vsel %vm1596, %v1607, %v1609
    %v1611 = vshll.u32 %v1571, 8
    %v1612 = vand.u32 %v1611, 65535
    %v1613 = vshrl.u32 %v1611, 16
    %v1614 = vand.u32 %v1610, 65535
    %v1615 = vshrl.u32 %v1610, 16
    %v1616 = vmul.u32 %v1612, %v1614
    %v1617 = vmul.u32 %v1612, %v1615
    %v1618 = vmul.u32 %v1613, %v1614
    %v1619 = vmul.u32 %v1613, %v1615
    %v1620 = vshll.u32 %v1617, 16
    %v1621 = vshrl.u32 %v1617, 16
    %v1622 = vshll.u32 %v1618, 16
    %v1623 = vshrl.u32 %v1618, 16
    %vm1624 = vc.u32 %v1616, %v1620
    %v1625 = vsel %vm1624, 1, 0
    %v1626 = vadd.s32 %v1616, %v1620
    %v1627 = vadd.s32 %v1619, %v1625
    %vm1628 = vc.u32 %v1626, %v1622
    %v1629 = vsel %vm1628, 1, 0
    %v1630 = vadd.s32 %v1626, %v1622
    %v1631 = vadd.s32 %v1627, %v1629
    %v1632 = vadd.s32 %v1631, %v1621
    %v1633 = vadd.s32 %v1632, %v1623
    %v1634 = vand.u32 %v1611, 65535
    %v1635 = vshrl.u32 %v1611, 16
    %v1636 = vand.u32 %v1606, 65535
    %v1637 = vshrl.u32 %v1606, 16
    %v1638 = vmul.u32 %v1634, %v1636
    %v1639 = vmul.u32 %v1634, %v1637
    %v1640 = vmul.u32 %v1635, %v1636
    %v1641 = vmul.u32 %v1635, %v1637
    %v1642 = vshll.u32 %v1639, 16
    %v1643 = vshrl.u32 %v1639, 16
    %v1644 = vshll.u32 %v1640, 16
    %v1645 = vshrl.u32 %v1640, 16
    %vm1646 = vc.u32 %v1638, %v1642
    %v1647 = vsel %vm1646, 1, 0
    %v1648 = vadd.s32 %v1638, %v1642
    %v1649 = vadd.s32 %v1641, %v1647
    %vm1650 = vc.u32 %v1648, %v1644
    %v1651 = vsel %vm1650, 1, 0
    %v1652 = vadd.s32 %v1648, %v1644
    %v1653 = vadd.s32 %v1649, %v1651
    %v1654 = vadd.s32 %v1653, %v1643
    %v1655 = vadd.s32 %v1654, %v1645
    %v1656 = vmul.u32 %v1611, %v1602
    %v1657 = vadd.s32 %v1633, %v1652
    %vm1658 = vc.u32 %v1633, %v1652
    %v1659 = vadd.s32 %v1655, 1
    %v1660 = vsel %vm1658, %v1659, %v1655
    %v1661 = vadd.s32 %v1656, %v1660
    %v1662 = vadd.s32 %v1661, 536870912
    %v1663 = vshrl.u32 %v1662, 30
    %v1664 = vshll.u32 %v1663, 30
    %v1665 = vsub.s32 %v1661, %v1664
    %vm1666 = vcmp.lt.s32.totalorder %v1665, 0
    %v1667 = vsub.s32 0, %v1665
    %v1668 = vsel %vm1666, %v1667, %v1665
    %v1669 = vclz %v1668
    %v1670 = vsub.s32 %v1669, 2
    %vm1671 = vcmp.gt.s32.totalorder 0, %v1670
    %v1672 = vsel %vm1671, 0, %v1670
    %v1673 = vsub.s32 32, %v1672
    %v1674 = vshll.u32 %v1665, %v1672
    %v1675 = vshrl.u32 %v1657, %v1673
    %v1676 = vor.u32 %v1674, %v1675
    %v1677 = vsub.s32 4294967266, %v1672
    %v1678 = vadd.s32 %v1677, 127
    %v1679 = vshll.u32 %v1678, 23
    %v1680 = vor.u32 4788187, %v1679
    %v1681 = vand.u32 2147483647, %v1680
    %v1683 = vcvt.s32.f32 %v1676
    %v1684 = vmul.f32 %v1683, %v1681
    %v1685 = vxor.u32 %v1684, 2147483648
    %v1686 = vsel %vm1565, %v1685, %v1684
    %v1687 = vsub.s32 4, %v1663
    %v1688 = vsel %vm1565, %v1687, %v1663
    %v1689 = vsel %vm1564, %v171, %v1686
    %v1690 = vsel %vm1564, 0, %v1688
    %v1691 = vmul.f32 %v1689, %v1689
    %v1692 = vmul.f32 %v1691, -0.001358992
    %v1693 = vadd.f32 %v1692, 0.041655596
    %v1694 = vmul.f32 %v1691, %v1693
    %v1695 = vadd.f32 %v1694, -0.4999988
    %v1696 = vmul.f32 %v1691, %v1695
    %v1697 = vadd.f32 1.0, %v1696
    %v1698 = vmul.f32 %v1689, %v1689
    %v1699 = vmul.f32 %v1698, -0.00019511016
    %v1700 = vadd.f32 %v1699, 0.008332121
    %v1701 = vmul.f32 %v1698, %v1700
    %v1702 = vadd.f32 %v1701, -0.16666654
    %v1703 = vmul.f32 %v1698, %v1702
    %v1704 = vadd.f32 %v1703, 1.0
    %v1705 = vmul.f32 %v1704, %v1689
    %vm1706 = vweird.f32 %v171
    %v1707 = vadd.s32 %v1690, 3
    %v1708 = vand.u32 %v1707, 3
    %vm1709 = vcmp.lt.s32.totalorder %v1708, 2
    %vm1710 = vcmp.eq.s32.totalorder %v1708, 0
    %v1711 = vxor.u32 %v1705, 2147483648
    %v1712 = vsel %vm1710, %v1697, %v1711
    %vm1713 = vcmp.eq.s32.totalorder %v1708, 2
    %v1714 = vxor.u32 %v1697, 2147483648
    %v1715 = vsel %vm1713, %v1714, %v1705
    %v1716 = vsel %vm1709, %v1712, %v1715
    %v1717 = vsel %vm1706, nan, %v1716
    %v1718 = vadd.f32 %v326, %v480
    %v1719 = vadd.f32 %v1718, %v634
    %1720 = vadd.xlane.f32.xlu0 %v1719
    %v1721 = vpop.xlane.xlu0 %1720
    %v1722 = vmul.f32 %v1721, 0.0026041667
    %v1723 = vadd.f32 %v1097, %v1252
    %v1724 = vadd.f32 %v1723, %v1407
    %1725 = vadd.xlane.f32.xlu0 %v1724
    %v1726 = vpop.xlane.xlu0 %1725
    %v1727 = vmul.f32 %v1726, 0.0026041667
    %v1728 = vadd.f32 %v788, %v942
    %1729 = vadd.xlane.f32.xlu0 %v1728
    %v1730 = vpop.xlane.xlu0 %1729
    %v1731 = vmul.f32 %v1730, 0.00390625
    %v1732 = vadd.f32 %v1562, %v1717
    %1733 = vadd.xlane.f32.xlu0 %v1732
    %v1734 = vpop.xlane.xlu0 %1733
    %v1735 = vmul.f32 %v1734, 0.00390625
    %v1736 = vsub.f32 %v1722, %v1731
    %v1737 = vsub.f32 %v1727, %v1735
    %v1738 = vmul.f32 %v1736, %v1736
    %v1739 = vmul.f32 %v1737, %v1737
    %v1740 = vadd.f32 %v1738, %v1739
    %v1741 = vrot.slane %v1740, 4
    %v1742 = vadd.f32 %v1740, %v1741
    %v1743 = vrot.slane %v1742, 2
    %v1744 = vadd.f32 %v1742, %v1743
    %v1745 = vrot.slane %v1744, 1
    %v1746 = vadd.f32 %v1744, %v1745
    %v1747 = vmul.f32 %v1746, -0.125
    %vm1748 = vcmask 0
    %1749 = vst.msk [vmem:[#allocation7] sm:$0x1] %vm1748, %v1747
    // Predicated region
    $region18: #{tpu_custom_call.1} parent=1 // pred_check
      _
    $region19: #{tpu_custom_call.1} parent=1 // pred_check_branch
      %1751 = sbr.rel (0) target = $region21
    $region20: #{tpu_custom_call.1} parent=1 // pred_region
      %1753 = vsyncadd [#allocation4], 0
      %s1755 = sshll.u32 [#allocation7], 4
      %s1756 = int_to_ptr.vmem [resolvable:$true] %s1755
      %s1757 = sshll.u32 %s2, 4
      %s1758 = int_to_ptr.hbm [resolvable:$true] %s1757
      %1760 = dma.vmem_to_hbm [thread:$0]  %s1756, 16, %s1758, [#allocation4]
    $region21: #{tpu_custom_call.1} parent=1 // pred_fallthru
      _
    // Predicated region
    $region22: #{tpu_custom_call.1} parent=1 // pred_check
      _
    $region23: #{tpu_custom_call.1} parent=1 // pred_check_branch
      %1762 = sbr.rel (0) target = $region25
    $region24: #{tpu_custom_call.1} parent=1 // pred_region
      %1764 = dma.done [#allocation4], 16
    $region25: #{tpu_custom_call.1} parent=1 // pred_fallthru
      _
    %1765 = vsyncpa [#allocation3], 1
    %1766 = vsyncpa [#allocation6], 1
    %1767 = vsyncpa [#allocation4], 1

</llo_original>
